<compile_context>
chip_gen: v7x
topology: tpu7x:2x2x1
jax: 0.10.0
libtpu: 0.0.40
codegen_flags: <defaults>
</compile_context>

<pallas_src>
import functools

import jax
import jax.numpy as jnp
from jax.experimental import pallas as pl
from jax.experimental.pallas import tpu as pltpu


def _scatter_kernel(flat_ref, feat_ref, dense_in_ref, dense_out_ref, sem_ref, *, tp):
    """Scatter one chunk of TP voxel rows into the HBM dense buffer.

    flat_ref      : SMEM (P_pad,) int32   -- flat row index per voxel (scalar prefetch)
    feat_ref      : VMEM (TP, C) float32  -- this chunk's voxel features (auto-pipelined)
    dense_in_ref  : ANY/HBM (M_pad, C)    -- pre-zeroed buffer (aliased with output)
    dense_out_ref : ANY/HBM (M_pad, C)    -- output buffer (same memory as dense_in_ref)
    sem_ref       : DMA semaphores (TP,)
    """
    del dense_in_ref  # aliased; all writes go through the output ref
    base = pl.program_id(0) * tp

    # Issue all TP row copies, each on its own semaphore -> TP DMAs in flight.
    # Python loop is fully unrolled at trace time (LLO sees all issues at once).
    for i in range(tp):
        row = flat_ref[base + i]
        pltpu.make_async_copy(
            feat_ref.at[i], dense_out_ref.at[row], sem_ref.at[i]
        ).start()

    # Drain before returning: the input pipeline refills feat_ref's physical buffer
    # two grid steps later, so no copy reading from it may still be in flight.
    for i in range(tp):
        pltpu.make_async_copy(
            feat_ref.at[i], dense_out_ref.at[0], sem_ref.at[i]
        ).wait()


@functools.partial(jax.jit, static_argnames=("N", "C", "D", "H", "W", "tp"))
def sparse_to_dense_bev(voxel_features, voxel_coords, N, C, D, H, W, tp=16):
    """Pallas equivalent of encoded_spconv_tensor.dense() + view(N, C*D, H, W)."""
    P = voxel_features.shape[0]
    M = N * D * H * W
    M_pad = M + 8  # trailing trash rows for invalid / padded voxels

    # --- wrapper-side index math (1 scalar per voxel instead of a [P,4] table) ---
    b = voxel_coords[:, 0]
    z = voxel_coords[:, 1]
    y = voxel_coords[:, 2]
    x = voxel_coords[:, 3]
    flat = ((b * D + z) * H + y) * W + x
    valid = (b >= 0) & (flat >= 0) & (flat < M)
    flat = jnp.where(valid, flat, M).astype(jnp.int32)  # invalid -> trash row M

    # Pad voxel count to a multiple of tp; padded slots write zeros to the trash row.
    P_pad = ((P + tp - 1) // tp) * tp
    pad = P_pad - P
    feats = voxel_features
    if pad:
        flat = jnp.concatenate([flat, jnp.full((pad,), M, jnp.int32)])
        feats = jnp.concatenate(
            [feats, jnp.zeros((pad, C), voxel_features.dtype)], axis=0
        )

    # Dense grid zero-fill: a plain XLA broadcast in HBM, aliased into the kernel.
    zeros_buf = jnp.zeros((M_pad, C), voxel_features.dtype)

    dense_flat = pl.pallas_call(
        functools.partial(_scatter_kernel, tp=tp),
        out_shape=jax.ShapeDtypeStruct((M_pad, C), voxel_features.dtype),
        grid_spec=pltpu.PrefetchScalarGridSpec(
            num_scalar_prefetch=1,
            grid=(P_pad // tp,),
            in_specs=[
                pl.BlockSpec((tp, C), lambda g, flat_ref: (g, 0)),  # features chunk
                pl.BlockSpec(memory_space=pl.ANY),                  # zeroed dense (HBM)
            ],
            out_specs=pl.BlockSpec(memory_space=pl.ANY),            # dense out (HBM)
            scratch_shapes=[pltpu.SemaphoreType.DMA((tp,))],
        ),
        # call args are (flat, feats, zeros_buf): alias the zero buffer to output 0.
        input_output_aliases={2: 0},
        # Unique voxel indices would allow "parallel" (dual-TC on v7x); keep
        # "arbitrary" so duplicate indices stay deterministic last-write-wins.
        compiler_params=pltpu.CompilerParams(
            dimension_semantics=("arbitrary",),
        ),
    )(flat, feats, zeros_buf)

    # Glue: drop trash rows, channels-last -> PyTorch NCHW-style (N, C*D, H, W).
    # (channel index = c*D + d, exactly torch's .view of (N, C, D, H, W))
    dense = dense_flat[:M].reshape(N, D, H, W, C)
    spatial_features = jnp.transpose(dense, (0, 4, 1, 2, 3)).reshape(N, C * D, H, W)
    return spatial_features


class HeightCompression:
    """JAX/Pallas mirror of pcdet HeightCompression."""

    def __init__(self, num_bev_features):
        self.num_bev_features = num_bev_features

    def forward(self, batch_dict):
        feats = batch_dict["encoded_spconv_tensor_features"]       # (P, C)
        coords = batch_dict["encoded_spconv_tensor_indices"]       # (P, 4) [b, z, y, x]
        N, C, D, H, W = batch_dict["encoded_spconv_tensor_shape"]  # dense shape
        spatial_features = sparse_to_dense_bev(feats, coords, N, C, D, H, W)
        batch_dict["spatial_features"] = spatial_features
        batch_dict["spatial_features_stride"] = batch_dict["encoded_spconv_tensor_stride"]
        return batch_dict


if __name__ == "__main__":
    # Small shapes consistent with the module: dense (N, C, D, H, W) = (2, 32, 2, 16, 16)
    # -> NUM_BEV_FEATURES = C * D = 64.
    N, C, D, H, W = 2, 32, 2, 16, 16
    P = 64  # number of non-empty voxels in the sparse tensor

    key = jax.random.PRNGKey(0)
    k_idx, k_feat = jax.random.split(key)

    # Unique voxel locations (deterministic), decomposed into (b, z, y, x).
    flat_idx = jax.random.choice(k_idx, N * D * H * W, shape=(P,), replace=False)
    flat_idx = flat_idx.astype(jnp.int32)
    b_idx = flat_idx // (D * H * W)
    rem = flat_idx % (D * H * W)
    z_idx = rem // (H * W)
    rem = rem % (H * W)
    y_idx = rem // W
    x_idx = rem % W
    voxel_coords = jnp.stack([b_idx, z_idx, y_idx, x_idx], axis=1).astype(jnp.int32)
    voxel_features = jax.random.normal(k_feat, (P, C), dtype=jnp.float32)

    module = HeightCompression(num_bev_features=C * D)
    batch_dict = {
        "encoded_spconv_tensor_features": voxel_features,
        "encoded_spconv_tensor_indices": voxel_coords,
        "encoded_spconv_tensor_shape": (N, C, D, H, W),
        "encoded_spconv_tensor_stride": 8,
    }
    batch_dict = module.forward(batch_dict)
    out = batch_dict["spatial_features"]
    jax.block_until_ready(out)

    # Pure-JAX reference of spconv .dense() + view
    ref_dense = jnp.zeros((N, D, H, W, C), jnp.float32).at[
        b_idx, z_idx, y_idx, x_idx
    ].set(voxel_features)
    ref = jnp.transpose(ref_dense, (0, 4, 1, 2, 3)).reshape(N, C * D, H, W)

    assert out.shape == (N, C * D, H, W), out.shape
    assert batch_dict["spatial_features_stride"] == 8
    assert jnp.allclose(out, ref, atol=0.0, rtol=0.0), "mismatch vs reference scatter"

    print("KERNEL_OK")
</pallas_src>

<mosaic_0001>
module attributes {stable_mosaic.version = 11 : i64} {
  func.func @_scatter_kernel(%arg0: i32, %arg1: memref<64xi32, #tpu.memory_space<smem>>, %arg2: memref<16x32xf32, #tpu.memory_space<vmem>>, %arg3: memref<1032x32xf32, #tpu.memory_space<any>>, %arg4: memref<1032x32xf32, #tpu.memory_space<any>>, %arg5: memref<16x!tpu.dma_semaphore, #tpu.memory_space<semaphore_mem>>) attributes {dimension_semantics = [#tpu.dimension_semantics<arbitrary>], iteration_bounds = array<i64: 4>, scalar_prefetch = 1 : i64, scratch_operands = 1 : i64, tpu.core_type = #tpu.core_type<tc>, window_params = [{transform_indices = @transform_0, window_bounds = array<i64: 16, 32>}, {}, {}]} {
    %c16_i32 = arith.constant 16 : i32
    %0 = arith.muli %arg0, %c16_i32 : i32
    %c0_i32 = arith.constant 0 : i32
    %1 = arith.addi %0, %c0_i32 : i32
    %2 = arith.index_cast %1 : i32 to index
    %3 = memref.load %arg1[%2] : memref<64xi32, #tpu.memory_space<smem>>
    %c0_i32_0 = arith.constant 0 : i32
    %c0_i32_1 = arith.constant 0 : i32
    %c0_i32_2 = arith.constant 0 : i32
    %4 = tpu.memref_slice %arg2[%c0_i32_0, %c0_i32_2] : memref<16x32xf32, #tpu.memory_space<vmem>> -> memref<1x32xf32, #tpu.memory_space<vmem>>
    %5 = tpu.memref_squeeze %4 : memref<1x32xf32, #tpu.memory_space<vmem>> -> memref<32xf32, #tpu.memory_space<vmem>>
    %c0_i32_3 = arith.constant 0 : i32
    %6 = tpu.memref_slice %arg4[%3, %c0_i32_3] : memref<1032x32xf32, #tpu.memory_space<any>> -> memref<1x32xf32, #tpu.memory_space<any>>
    %7 = tpu.memref_squeeze %6 : memref<1x32xf32, #tpu.memory_space<any>> -> memref<32xf32, #tpu.memory_space<any>>
    %8 = tpu.memref_slice %arg5[%c0_i32_1] : memref<16x!tpu.dma_semaphore, #tpu.memory_space<semaphore_mem>> -> memref<1x!tpu.dma_semaphore, #tpu.memory_space<semaphore_mem>>
    %9 = tpu.memref_squeeze %8 : memref<1x!tpu.dma_semaphore, #tpu.memory_space<semaphore_mem>> -> memref<!tpu.dma_semaphore, #tpu.memory_space<semaphore_mem>>
    tpu.enqueue_dma source(%5 : memref<32xf32, #tpu.memory_space<vmem>>) target(%7 : memref<32xf32, #tpu.memory_space<any>>) target_semaphore(%9 : memref<!tpu.dma_semaphore, #tpu.memory_space<semaphore_mem>>)
    %c1_i32 = arith.constant 1 : i32
    %10 = arith.addi %0, %c1_i32 : i32
    %11 = arith.index_cast %10 : i32 to index
    %12 = memref.load %arg1[%11] : memref<64xi32, #tpu.memory_space<smem>>
    %c1_i32_4 = arith.constant 1 : i32
    %c1_i32_5 = arith.constant 1 : i32
    %c0_i32_6 = arith.constant 0 : i32
    %13 = tpu.memref_slice %arg2[%c1_i32_4, %c0_i32_6] : memref<16x32xf32, #tpu.memory_space<vmem>> -> memref<1x32xf32, #tpu.memory_space<vmem>>
    %14 = tpu.memref_squeeze %13 : memref<1x32xf32, #tpu.memory_space<vmem>> -> memref<32xf32, #tpu.memory_space<vmem>>
    %c0_i32_7 = arith.constant 0 : i32
    %15 = tpu.memref_slice %arg4[%12, %c0_i32_7] : memref<1032x32xf32, #tpu.memory_space<any>> -> memref<1x32xf32, #tpu.memory_space<any>>
    %16 = tpu.memref_squeeze %15 : memref<1x32xf32, #tpu.memory_space<any>> -> memref<32xf32, #tpu.memory_space<any>>
    %17 = tpu.memref_slice %arg5[%c1_i32_5] : memref<16x!tpu.dma_semaphore, #tpu.memory_space<semaphore_mem>> -> memref<1x!tpu.dma_semaphore, #tpu.memory_space<semaphore_mem>>
    %18 = tpu.memref_squeeze %17 : memref<1x!tpu.dma_semaphore, #tpu.memory_space<semaphore_mem>> -> memref<!tpu.dma_semaphore, #tpu.memory_space<semaphore_mem>>
    tpu.enqueue_dma source(%14 : memref<32xf32, #tpu.memory_space<vmem>>) target(%16 : memref<32xf32, #tpu.memory_space<any>>) target_semaphore(%18 : memref<!tpu.dma_semaphore, #tpu.memory_space<semaphore_mem>>)
    %c2_i32 = arith.constant 2 : i32
    %19 = arith.addi %0, %c2_i32 : i32
    %20 = arith.index_cast %19 : i32 to index
    %21 = memref.load %arg1[%20] : memref<64xi32, #tpu.memory_space<smem>>
    %c2_i32_8 = arith.constant 2 : i32
    %c2_i32_9 = arith.constant 2 : i32
    %c0_i32_10 = arith.constant 0 : i32
    %22 = tpu.memref_slice %arg2[%c2_i32_8, %c0_i32_10] : memref<16x32xf32, #tpu.memory_space<vmem>> -> memref<1x32xf32, #tpu.memory_space<vmem>>
    %23 = tpu.memref_squeeze %22 : memref<1x32xf32, #tpu.memory_space<vmem>> -> memref<32xf32, #tpu.memory_space<vmem>>
    %c0_i32_11 = arith.constant 0 : i32
    %24 = tpu.memref_slice %arg4[%21, %c0_i32_11] : memref<1032x32xf32, #tpu.memory_space<any>> -> memref<1x32xf32, #tpu.memory_space<any>>
    %25 = tpu.memref_squeeze %24 : memref<1x32xf32, #tpu.memory_space<any>> -> memref<32xf32, #tpu.memory_space<any>>
    %26 = tpu.memref_slice %arg5[%c2_i32_9] : memref<16x!tpu.dma_semaphore, #tpu.memory_space<semaphore_mem>> -> memref<1x!tpu.dma_semaphore, #tpu.memory_space<semaphore_mem>>
    %27 = tpu.memref_squeeze %26 : memref<1x!tpu.dma_semaphore, #tpu.memory_space<semaphore_mem>> -> memref<!tpu.dma_semaphore, #tpu.memory_space<semaphore_mem>>
    tpu.enqueue_dma source(%23 : memref<32xf32, #tpu.memory_space<vmem>>) target(%25 : memref<32xf32, #tpu.memory_space<any>>) target_semaphore(%27 : memref<!tpu.dma_semaphore, #tpu.memory_space<semaphore_mem>>)
    %c3_i32 = arith.constant 3 : i32
    %28 = arith.addi %0, %c3_i32 : i32
    %29 = arith.index_cast %28 : i32 to index
    %30 = memref.load %arg1[%29] : memref<64xi32, #tpu.memory_space<smem>>
    %c3_i32_12 = arith.constant 3 : i32
    %c3_i32_13 = arith.constant 3 : i32
    %c0_i32_14 = arith.constant 0 : i32
    %31 = tpu.memref_slice %arg2[%c3_i32_12, %c0_i32_14] : memref<16x32xf32, #tpu.memory_space<vmem>> -> memref<1x32xf32, #tpu.memory_space<vmem>>
    %32 = tpu.memref_squeeze %31 : memref<1x32xf32, #tpu.memory_space<vmem>> -> memref<32xf32, #tpu.memory_space<vmem>>
    %c0_i32_15 = arith.constant 0 : i32
    %33 = tpu.memref_slice %arg4[%30, %c0_i32_15] : memref<1032x32xf32, #tpu.memory_space<any>> -> memref<1x32xf32, #tpu.memory_space<any>>
    %34 = tpu.memref_squeeze %33 : memref<1x32xf32, #tpu.memory_space<any>> -> memref<32xf32, #tpu.memory_space<any>>
    %35 = tpu.memref_slice %arg5[%c3_i32_13] : memref<16x!tpu.dma_semaphore, #tpu.memory_space<semaphore_mem>> -> memref<1x!tpu.dma_semaphore, #tpu.memory_space<semaphore_mem>>
    %36 = tpu.memref_squeeze %35 : memref<1x!tpu.dma_semaphore, #tpu.memory_space<semaphore_mem>> -> memref<!tpu.dma_semaphore, #tpu.memory_space<semaphore_mem>>
    tpu.enqueue_dma source(%32 : memref<32xf32, #tpu.memory_space<vmem>>) target(%34 : memref<32xf32, #tpu.memory_space<any>>) target_semaphore(%36 : memref<!tpu.dma_semaphore, #tpu.memory_space<semaphore_mem>>)
    %c4_i32 = arith.constant 4 : i32
    %37 = arith.addi %0, %c4_i32 : i32
    %38 = arith.index_cast %37 : i32 to index
    %39 = memref.load %arg1[%38] : memref<64xi32, #tpu.memory_space<smem>>
    %c4_i32_16 = arith.constant 4 : i32
    %c4_i32_17 = arith.constant 4 : i32
    %c0_i32_18 = arith.constant 0 : i32
    %40 = tpu.memref_slice %arg2[%c4_i32_16, %c0_i32_18] : memref<16x32xf32, #tpu.memory_space<vmem>> -> memref<1x32xf32, #tpu.memory_space<vmem>>
    %41 = tpu.memref_squeeze %40 : memref<1x32xf32, #tpu.memory_space<vmem>> -> memref<32xf32, #tpu.memory_space<vmem>>
    %c0_i32_19 = arith.constant 0 : i32
    %42 = tpu.memref_slice %arg4[%39, %c0_i32_19] : memref<1032x32xf32, #tpu.memory_space<any>> -> memref<1x32xf32, #tpu.memory_space<any>>
    %43 = tpu.memref_squeeze %42 : memref<1x32xf32, #tpu.memory_space<any>> -> memref<32xf32, #tpu.memory_space<any>>
    %44 = tpu.memref_slice %arg5[%c4_i32_17] : memref<16x!tpu.dma_semaphore, #tpu.memory_space<semaphore_mem>> -> memref<1x!tpu.dma_semaphore, #tpu.memory_space<semaphore_mem>>
    %45 = tpu.memref_squeeze %44 : memref<1x!tpu.dma_semaphore, #tpu.memory_space<semaphore_mem>> -> memref<!tpu.dma_semaphore, #tpu.memory_space<semaphore_mem>>
    tpu.enqueue_dma source(%41 : memref<32xf32, #tpu.memory_space<vmem>>) target(%43 : memref<32xf32, #tpu.memory_space<any>>) target_semaphore(%45 : memref<!tpu.dma_semaphore, #tpu.memory_space<semaphore_mem>>)
    %c5_i32 = arith.constant 5 : i32
    %46 = arith.addi %0, %c5_i32 : i32
    %47 = arith.index_cast %46 : i32 to index
    %48 = memref.load %arg1[%47] : memref<64xi32, #tpu.memory_space<smem>>
    %c5_i32_20 = arith.constant 5 : i32
    %c5_i32_21 = arith.constant 5 : i32
    %c0_i32_22 = arith.constant 0 : i32
    %49 = tpu.memref_slice %arg2[%c5_i32_20, %c0_i32_22] : memref<16x32xf32, #tpu.memory_space<vmem>> -> memref<1x32xf32, #tpu.memory_space<vmem>>
    %50 = tpu.memref_squeeze %49 : memref<1x32xf32, #tpu.memory_space<vmem>> -> memref<32xf32, #tpu.memory_space<vmem>>
    %c0_i32_23 = arith.constant 0 : i32
    %51 = tpu.memref_slice %arg4[%48, %c0_i32_23] : memref<1032x32xf32, #tpu.memory_space<any>> -> memref<1x32xf32, #tpu.memory_space<any>>
    %52 = tpu.memref_squeeze %51 : memref<1x32xf32, #tpu.memory_space<any>> -> memref<32xf32, #tpu.memory_space<any>>
    %53 = tpu.memref_slice %arg5[%c5_i32_21] : memref<16x!tpu.dma_semaphore, #tpu.memory_space<semaphore_mem>> -> memref<1x!tpu.dma_semaphore, #tpu.memory_space<semaphore_mem>>
    %54 = tpu.memref_squeeze %53 : memref<1x!tpu.dma_semaphore, #tpu.memory_space<semaphore_mem>> -> memref<!tpu.dma_semaphore, #tpu.memory_space<semaphore_mem>>
    tpu.enqueue_dma source(%50 : memref<32xf32, #tpu.memory_space<vmem>>) target(%52 : memref<32xf32, #tpu.memory_space<any>>) target_semaphore(%54 : memref<!tpu.dma_semaphore, #tpu.memory_space<semaphore_mem>>)
    %c6_i32 = arith.constant 6 : i32
    %55 = arith.addi %0, %c6_i32 : i32
    %56 = arith.index_cast %55 : i32 to index
    %57 = memref.load %arg1[%56] : memref<64xi32, #tpu.memory_space<smem>>
    %c6_i32_24 = arith.constant 6 : i32
    %c6_i32_25 = arith.constant 6 : i32
    %c0_i32_26 = arith.constant 0 : i32
    %58 = tpu.memref_slice %arg2[%c6_i32_24, %c0_i32_26] : memref<16x32xf32, #tpu.memory_space<vmem>> -> memref<1x32xf32, #tpu.memory_space<vmem>>
    %59 = tpu.memref_squeeze %58 : memref<1x32xf32, #tpu.memory_space<vmem>> -> memref<32xf32, #tpu.memory_space<vmem>>
    %c0_i32_27 = arith.constant 0 : i32
    %60 = tpu.memref_slice %arg4[%57, %c0_i32_27] : memref<1032x32xf32, #tpu.memory_space<any>> -> memref<1x32xf32, #tpu.memory_space<any>>
    %61 = tpu.memref_squeeze %60 : memref<1x32xf32, #tpu.memory_space<any>> -> memref<32xf32, #tpu.memory_space<any>>
    %62 = tpu.memref_slice %arg5[%c6_i32_25] : memref<16x!tpu.dma_semaphore, #tpu.memory_space<semaphore_mem>> -> memref<1x!tpu.dma_semaphore, #tpu.memory_space<semaphore_mem>>
    %63 = tpu.memref_squeeze %62 : memref<1x!tpu.dma_semaphore, #tpu.memory_space<semaphore_mem>> -> memref<!tpu.dma_semaphore, #tpu.memory_space<semaphore_mem>>
    tpu.enqueue_dma source(%59 : memref<32xf32, #tpu.memory_space<vmem>>) target(%61 : memref<32xf32, #tpu.memory_space<any>>) target_semaphore(%63 : memref<!tpu.dma_semaphore, #tpu.memory_space<semaphore_mem>>)
    %c7_i32 = arith.constant 7 : i32
    %64 = arith.addi %0, %c7_i32 : i32
    %65 = arith.index_cast %64 : i32 to index
    %66 = memref.load %arg1[%65] : memref<64xi32, #tpu.memory_space<smem>>
    %c7_i32_28 = arith.constant 7 : i32
    %c7_i32_29 = arith.constant 7 : i32
    %c0_i32_30 = arith.constant 0 : i32
    %67 = tpu.memref_slice %arg2[%c7_i32_28, %c0_i32_30] : memref<16x32xf32, #tpu.memory_space<vmem>> -> memref<1x32xf32, #tpu.memory_space<vmem>>
    %68 = tpu.memref_squeeze %67 : memref<1x32xf32, #tpu.memory_space<vmem>> -> memref<32xf32, #tpu.memory_space<vmem>>
    %c0_i32_31 = arith.constant 0 : i32
    %69 = tpu.memref_slice %arg4[%66, %c0_i32_31] : memref<1032x32xf32, #tpu.memory_space<any>> -> memref<1x32xf32, #tpu.memory_space<any>>
    %70 = tpu.memref_squeeze %69 : memref<1x32xf32, #tpu.memory_space<any>> -> memref<32xf32, #tpu.memory_space<any>>
    %71 = tpu.memref_slice %arg5[%c7_i32_29] : memref<16x!tpu.dma_semaphore, #tpu.memory_space<semaphore_mem>> -> memref<1x!tpu.dma_semaphore, #tpu.memory_space<semaphore_mem>>
    %72 = tpu.memref_squeeze %71 : memref<1x!tpu.dma_semaphore, #tpu.memory_space<semaphore_mem>> -> memref<!tpu.dma_semaphore, #tpu.memory_space<semaphore_mem>>
    tpu.enqueue_dma source(%68 : memref<32xf32, #tpu.memory_space<vmem>>) target(%70 : memref<32xf32, #tpu.memory_space<any>>) target_semaphore(%72 : memref<!tpu.dma_semaphore, #tpu.memory_space<semaphore_mem>>)
    %c8_i32 = arith.constant 8 : i32
    %73 = arith.addi %0, %c8_i32 : i32
    %74 = arith.index_cast %73 : i32 to index
    %75 = memref.load %arg1[%74] : memref<64xi32, #tpu.memory_space<smem>>
    %c8_i32_32 = arith.constant 8 : i32
    %c8_i32_33 = arith.constant 8 : i32
    %c0_i32_34 = arith.constant 0 : i32
    %76 = tpu.memref_slice %arg2[%c8_i32_32, %c0_i32_34] : memref<16x32xf32, #tpu.memory_space<vmem>> -> memref<1x32xf32, #tpu.memory_space<vmem>>
    %77 = tpu.memref_squeeze %76 : memref<1x32xf32, #tpu.memory_space<vmem>> -> memref<32xf32, #tpu.memory_space<vmem>>
    %c0_i32_35 = arith.constant 0 : i32
    %78 = tpu.memref_slice %arg4[%75, %c0_i32_35] : memref<1032x32xf32, #tpu.memory_space<any>> -> memref<1x32xf32, #tpu.memory_space<any>>
    %79 = tpu.memref_squeeze %78 : memref<1x32xf32, #tpu.memory_space<any>> -> memref<32xf32, #tpu.memory_space<any>>
    %80 = tpu.memref_slice %arg5[%c8_i32_33] : memref<16x!tpu.dma_semaphore, #tpu.memory_space<semaphore_mem>> -> memref<1x!tpu.dma_semaphore, #tpu.memory_space<semaphore_mem>>
    %81 = tpu.memref_squeeze %80 : memref<1x!tpu.dma_semaphore, #tpu.memory_space<semaphore_mem>> -> memref<!tpu.dma_semaphore, #tpu.memory_space<semaphore_mem>>
    tpu.enqueue_dma source(%77 : memref<32xf32, #tpu.memory_space<vmem>>) target(%79 : memref<32xf32, #tpu.memory_space<any>>) target_semaphore(%81 : memref<!tpu.dma_semaphore, #tpu.memory_space<semaphore_mem>>)
    %c9_i32 = arith.constant 9 : i32
    %82 = arith.addi %0, %c9_i32 : i32
    %83 = arith.index_cast %82 : i32 to index
    %84 = memref.load %arg1[%83] : memref<64xi32, #tpu.memory_space<smem>>
    %c9_i32_36 = arith.constant 9 : i32
    %c9_i32_37 = arith.constant 9 : i32
    %c0_i32_38 = arith.constant 0 : i32
    %85 = tpu.memref_slice %arg2[%c9_i32_36, %c0_i32_38] : memref<16x32xf32, #tpu.memory_space<vmem>> -> memref<1x32xf32, #tpu.memory_space<vmem>>
    %86 = tpu.memref_squeeze %85 : memref<1x32xf32, #tpu.memory_space<vmem>> -> memref<32xf32, #tpu.memory_space<vmem>>
    %c0_i32_39 = arith.constant 0 : i32
    %87 = tpu.memref_slice %arg4[%84, %c0_i32_39] : memref<1032x32xf32, #tpu.memory_space<any>> -> memref<1x32xf32, #tpu.memory_space<any>>
    %88 = tpu.memref_squeeze %87 : memref<1x32xf32, #tpu.memory_space<any>> -> memref<32xf32, #tpu.memory_space<any>>
    %89 = tpu.memref_slice %arg5[%c9_i32_37] : memref<16x!tpu.dma_semaphore, #tpu.memory_space<semaphore_mem>> -> memref<1x!tpu.dma_semaphore, #tpu.memory_space<semaphore_mem>>
    %90 = tpu.memref_squeeze %89 : memref<1x!tpu.dma_semaphore, #tpu.memory_space<semaphore_mem>> -> memref<!tpu.dma_semaphore, #tpu.memory_space<semaphore_mem>>
    tpu.enqueue_dma source(%86 : memref<32xf32, #tpu.memory_space<vmem>>) target(%88 : memref<32xf32, #tpu.memory_space<any>>) target_semaphore(%90 : memref<!tpu.dma_semaphore, #tpu.memory_space<semaphore_mem>>)
    %c10_i32 = arith.constant 10 : i32
    %91 = arith.addi %0, %c10_i32 : i32
    %92 = arith.index_cast %91 : i32 to index
    %93 = memref.load %arg1[%92] : memref<64xi32, #tpu.memory_space<smem>>
    %c10_i32_40 = arith.constant 10 : i32
    %c10_i32_41 = arith.constant 10 : i32
    %c0_i32_42 = arith.constant 0 : i32
    %94 = tpu.memref_slice %arg2[%c10_i32_40, %c0_i32_42] : memref<16x32xf32, #tpu.memory_space<vmem>> -> memref<1x32xf32, #tpu.memory_space<vmem>>
    %95 = tpu.memref_squeeze %94 : memref<1x32xf32, #tpu.memory_space<vmem>> -> memref<32xf32, #tpu.memory_space<vmem>>
    %c0_i32_43 = arith.constant 0 : i32
    %96 = tpu.memref_slice %arg4[%93, %c0_i32_43] : memref<1032x32xf32, #tpu.memory_space<any>> -> memref<1x32xf32, #tpu.memory_space<any>>
    %97 = tpu.memref_squeeze %96 : memref<1x32xf32, #tpu.memory_space<any>> -> memref<32xf32, #tpu.memory_space<any>>
    %98 = tpu.memref_slice %arg5[%c10_i32_41] : memref<16x!tpu.dma_semaphore, #tpu.memory_space<semaphore_mem>> -> memref<1x!tpu.dma_semaphore, #tpu.memory_space<semaphore_mem>>
    %99 = tpu.memref_squeeze %98 : memref<1x!tpu.dma_semaphore, #tpu.memory_space<semaphore_mem>> -> memref<!tpu.dma_semaphore, #tpu.memory_space<semaphore_mem>>
    tpu.enqueue_dma source(%95 : memref<32xf32, #tpu.memory_space<vmem>>) target(%97 : memref<32xf32, #tpu.memory_space<any>>) target_semaphore(%99 : memref<!tpu.dma_semaphore, #tpu.memory_space<semaphore_mem>>)
    %c11_i32 = arith.constant 11 : i32
    %100 = arith.addi %0, %c11_i32 : i32
    %101 = arith.index_cast %100 : i32 to index
    %102 = memref.load %arg1[%101] : memref<64xi32, #tpu.memory_space<smem>>
    %c11_i32_44 = arith.constant 11 : i32
    %c11_i32_45 = arith.constant 11 : i32
    %c0_i32_46 = arith.constant 0 : i32
    %103 = tpu.memref_slice %arg2[%c11_i32_44, %c0_i32_46] : memref<16x32xf32, #tpu.memory_space<vmem>> -> memref<1x32xf32, #tpu.memory_space<vmem>>
    %104 = tpu.memref_squeeze %103 : memref<1x32xf32, #tpu.memory_space<vmem>> -> memref<32xf32, #tpu.memory_space<vmem>>
    %c0_i32_47 = arith.constant 0 : i32
    %105 = tpu.memref_slice %arg4[%102, %c0_i32_47] : memref<1032x32xf32, #tpu.memory_space<any>> -> memref<1x32xf32, #tpu.memory_space<any>>
    %106 = tpu.memref_squeeze %105 : memref<1x32xf32, #tpu.memory_space<any>> -> memref<32xf32, #tpu.memory_space<any>>
    %107 = tpu.memref_slice %arg5[%c11_i32_45] : memref<16x!tpu.dma_semaphore, #tpu.memory_space<semaphore_mem>> -> memref<1x!tpu.dma_semaphore, #tpu.memory_space<semaphore_mem>>
    %108 = tpu.memref_squeeze %107 : memref<1x!tpu.dma_semaphore, #tpu.memory_space<semaphore_mem>> -> memref<!tpu.dma_semaphore, #tpu.memory_space<semaphore_mem>>
    tpu.enqueue_dma source(%104 : memref<32xf32, #tpu.memory_space<vmem>>) target(%106 : memref<32xf32, #tpu.memory_space<any>>) target_semaphore(%108 : memref<!tpu.dma_semaphore, #tpu.memory_space<semaphore_mem>>)
    %c12_i32 = arith.constant 12 : i32
    %109 = arith.addi %0, %c12_i32 : i32
    %110 = arith.index_cast %109 : i32 to index
    %111 = memref.load %arg1[%110] : memref<64xi32, #tpu.memory_space<smem>>
    %c12_i32_48 = arith.constant 12 : i32
    %c12_i32_49 = arith.constant 12 : i32
    %c0_i32_50 = arith.constant 0 : i32
    %112 = tpu.memref_slice %arg2[%c12_i32_48, %c0_i32_50] : memref<16x32xf32, #tpu.memory_space<vmem>> -> memref<1x32xf32, #tpu.memory_space<vmem>>
    %113 = tpu.memref_squeeze %112 : memref<1x32xf32, #tpu.memory_space<vmem>> -> memref<32xf32, #tpu.memory_space<vmem>>
    %c0_i32_51 = arith.constant 0 : i32
    %114 = tpu.memref_slice %arg4[%111, %c0_i32_51] : memref<1032x32xf32, #tpu.memory_space<any>> -> memref<1x32xf32, #tpu.memory_space<any>>
    %115 = tpu.memref_squeeze %114 : memref<1x32xf32, #tpu.memory_space<any>> -> memref<32xf32, #tpu.memory_space<any>>
    %116 = tpu.memref_slice %arg5[%c12_i32_49] : memref<16x!tpu.dma_semaphore, #tpu.memory_space<semaphore_mem>> -> memref<1x!tpu.dma_semaphore, #tpu.memory_space<semaphore_mem>>
    %117 = tpu.memref_squeeze %116 : memref<1x!tpu.dma_semaphore, #tpu.memory_space<semaphore_mem>> -> memref<!tpu.dma_semaphore, #tpu.memory_space<semaphore_mem>>
    tpu.enqueue_dma source(%113 : memref<32xf32, #tpu.memory_space<vmem>>) target(%115 : memref<32xf32, #tpu.memory_space<any>>) target_semaphore(%117 : memref<!tpu.dma_semaphore, #tpu.memory_space<semaphore_mem>>)
    %c13_i32 = arith.constant 13 : i32
    %118 = arith.addi %0, %c13_i32 : i32
    %119 = arith.index_cast %118 : i32 to index
    %120 = memref.load %arg1[%119] : memref<64xi32, #tpu.memory_space<smem>>
    %c13_i32_52 = arith.constant 13 : i32
    %c13_i32_53 = arith.constant 13 : i32
    %c0_i32_54 = arith.constant 0 : i32
    %121 = tpu.memref_slice %arg2[%c13_i32_52, %c0_i32_54] : memref<16x32xf32, #tpu.memory_space<vmem>> -> memref<1x32xf32, #tpu.memory_space<vmem>>
    %122 = tpu.memref_squeeze %121 : memref<1x32xf32, #tpu.memory_space<vmem>> -> memref<32xf32, #tpu.memory_space<vmem>>
    %c0_i32_55 = arith.constant 0 : i32
    %123 = tpu.memref_slice %arg4[%120, %c0_i32_55] : memref<1032x32xf32, #tpu.memory_space<any>> -> memref<1x32xf32, #tpu.memory_space<any>>
    %124 = tpu.memref_squeeze %123 : memref<1x32xf32, #tpu.memory_space<any>> -> memref<32xf32, #tpu.memory_space<any>>
    %125 = tpu.memref_slice %arg5[%c13_i32_53] : memref<16x!tpu.dma_semaphore, #tpu.memory_space<semaphore_mem>> -> memref<1x!tpu.dma_semaphore, #tpu.memory_space<semaphore_mem>>
    %126 = tpu.memref_squeeze %125 : memref<1x!tpu.dma_semaphore, #tpu.memory_space<semaphore_mem>> -> memref<!tpu.dma_semaphore, #tpu.memory_space<semaphore_mem>>
    tpu.enqueue_dma source(%122 : memref<32xf32, #tpu.memory_space<vmem>>) target(%124 : memref<32xf32, #tpu.memory_space<any>>) target_semaphore(%126 : memref<!tpu.dma_semaphore, #tpu.memory_space<semaphore_mem>>)
    %c14_i32 = arith.constant 14 : i32
    %127 = arith.addi %0, %c14_i32 : i32
    %128 = arith.index_cast %127 : i32 to index
    %129 = memref.load %arg1[%128] : memref<64xi32, #tpu.memory_space<smem>>
    %c14_i32_56 = arith.constant 14 : i32
    %c14_i32_57 = arith.constant 14 : i32
    %c0_i32_58 = arith.constant 0 : i32
    %130 = tpu.memref_slice %arg2[%c14_i32_56, %c0_i32_58] : memref<16x32xf32, #tpu.memory_space<vmem>> -> memref<1x32xf32, #tpu.memory_space<vmem>>
    %131 = tpu.memref_squeeze %130 : memref<1x32xf32, #tpu.memory_space<vmem>> -> memref<32xf32, #tpu.memory_space<vmem>>
    %c0_i32_59 = arith.constant 0 : i32
    %132 = tpu.memref_slice %arg4[%129, %c0_i32_59] : memref<1032x32xf32, #tpu.memory_space<any>> -> memref<1x32xf32, #tpu.memory_space<any>>
    %133 = tpu.memref_squeeze %132 : memref<1x32xf32, #tpu.memory_space<any>> -> memref<32xf32, #tpu.memory_space<any>>
    %134 = tpu.memref_slice %arg5[%c14_i32_57] : memref<16x!tpu.dma_semaphore, #tpu.memory_space<semaphore_mem>> -> memref<1x!tpu.dma_semaphore, #tpu.memory_space<semaphore_mem>>
    %135 = tpu.memref_squeeze %134 : memref<1x!tpu.dma_semaphore, #tpu.memory_space<semaphore_mem>> -> memref<!tpu.dma_semaphore, #tpu.memory_space<semaphore_mem>>
    tpu.enqueue_dma source(%131 : memref<32xf32, #tpu.memory_space<vmem>>) target(%133 : memref<32xf32, #tpu.memory_space<any>>) target_semaphore(%135 : memref<!tpu.dma_semaphore, #tpu.memory_space<semaphore_mem>>)
    %c15_i32 = arith.constant 15 : i32
    %136 = arith.addi %0, %c15_i32 : i32
    %137 = arith.index_cast %136 : i32 to index
    %138 = memref.load %arg1[%137] : memref<64xi32, #tpu.memory_space<smem>>
    %c15_i32_60 = arith.constant 15 : i32
    %c15_i32_61 = arith.constant 15 : i32
    %c0_i32_62 = arith.constant 0 : i32
    %139 = tpu.memref_slice %arg2[%c15_i32_60, %c0_i32_62] : memref<16x32xf32, #tpu.memory_space<vmem>> -> memref<1x32xf32, #tpu.memory_space<vmem>>
    %140 = tpu.memref_squeeze %139 : memref<1x32xf32, #tpu.memory_space<vmem>> -> memref<32xf32, #tpu.memory_space<vmem>>
    %c0_i32_63 = arith.constant 0 : i32
    %141 = tpu.memref_slice %arg4[%138, %c0_i32_63] : memref<1032x32xf32, #tpu.memory_space<any>> -> memref<1x32xf32, #tpu.memory_space<any>>
    %142 = tpu.memref_squeeze %141 : memref<1x32xf32, #tpu.memory_space<any>> -> memref<32xf32, #tpu.memory_space<any>>
    %143 = tpu.memref_slice %arg5[%c15_i32_61] : memref<16x!tpu.dma_semaphore, #tpu.memory_space<semaphore_mem>> -> memref<1x!tpu.dma_semaphore, #tpu.memory_space<semaphore_mem>>
    %144 = tpu.memref_squeeze %143 : memref<1x!tpu.dma_semaphore, #tpu.memory_space<semaphore_mem>> -> memref<!tpu.dma_semaphore, #tpu.memory_space<semaphore_mem>>
    tpu.enqueue_dma source(%140 : memref<32xf32, #tpu.memory_space<vmem>>) target(%142 : memref<32xf32, #tpu.memory_space<any>>) target_semaphore(%144 : memref<!tpu.dma_semaphore, #tpu.memory_space<semaphore_mem>>)
    %c0_i32_64 = arith.constant 0 : i32
    %c0_i32_65 = arith.constant 0 : i32
    %c0_i32_66 = arith.constant 0 : i32
    %c0_i32_67 = arith.constant 0 : i32
    %145 = tpu.memref_slice %arg2[%c0_i32_64, %c0_i32_67] : memref<16x32xf32, #tpu.memory_space<vmem>> -> memref<1x32xf32, #tpu.memory_space<vmem>>
    %146 = tpu.memref_squeeze %145 : memref<1x32xf32, #tpu.memory_space<vmem>> -> memref<32xf32, #tpu.memory_space<vmem>>
    %c0_i32_68 = arith.constant 0 : i32
    %147 = tpu.memref_slice %arg4[%c0_i32_65, %c0_i32_68] : memref<1032x32xf32, #tpu.memory_space<any>> -> memref<1x32xf32, #tpu.memory_space<any>>
    %148 = tpu.memref_squeeze %147 : memref<1x32xf32, #tpu.memory_space<any>> -> memref<32xf32, #tpu.memory_space<any>>
    %149 = tpu.memref_slice %arg5[%c0_i32_66] : memref<16x!tpu.dma_semaphore, #tpu.memory_space<semaphore_mem>> -> memref<1x!tpu.dma_semaphore, #tpu.memory_space<semaphore_mem>>
    %150 = tpu.memref_squeeze %149 : memref<1x!tpu.dma_semaphore, #tpu.memory_space<semaphore_mem>> -> memref<!tpu.dma_semaphore, #tpu.memory_space<semaphore_mem>>
    tpu.wait_dma2 semaphore(%150 : memref<!tpu.dma_semaphore, #tpu.memory_space<semaphore_mem>>) src(%146 : memref<32xf32, #tpu.memory_space<vmem>>) dst(%148 : memref<32xf32, #tpu.memory_space<any>>)
    %c1_i32_69 = arith.constant 1 : i32
    %c0_i32_70 = arith.constant 0 : i32
    %c1_i32_71 = arith.constant 1 : i32
    %c0_i32_72 = arith.constant 0 : i32
    %151 = tpu.memref_slice %arg2[%c1_i32_69, %c0_i32_72] : memref<16x32xf32, #tpu.memory_space<vmem>> -> memref<1x32xf32, #tpu.memory_space<vmem>>
    %152 = tpu.memref_squeeze %151 : memref<1x32xf32, #tpu.memory_space<vmem>> -> memref<32xf32, #tpu.memory_space<vmem>>
    %c0_i32_73 = arith.constant 0 : i32
    %153 = tpu.memref_slice %arg4[%c0_i32_70, %c0_i32_73] : memref<1032x32xf32, #tpu.memory_space<any>> -> memref<1x32xf32, #tpu.memory_space<any>>
    %154 = tpu.memref_squeeze %153 : memref<1x32xf32, #tpu.memory_space<any>> -> memref<32xf32, #tpu.memory_space<any>>
    %155 = tpu.memref_slice %arg5[%c1_i32_71] : memref<16x!tpu.dma_semaphore, #tpu.memory_space<semaphore_mem>> -> memref<1x!tpu.dma_semaphore, #tpu.memory_space<semaphore_mem>>
    %156 = tpu.memref_squeeze %155 : memref<1x!tpu.dma_semaphore, #tpu.memory_space<semaphore_mem>> -> memref<!tpu.dma_semaphore, #tpu.memory_space<semaphore_mem>>
    tpu.wait_dma2 semaphore(%156 : memref<!tpu.dma_semaphore, #tpu.memory_space<semaphore_mem>>) src(%152 : memref<32xf32, #tpu.memory_space<vmem>>) dst(%154 : memref<32xf32, #tpu.memory_space<any>>)
    %c2_i32_74 = arith.constant 2 : i32
    %c0_i32_75 = arith.constant 0 : i32
    %c2_i32_76 = arith.constant 2 : i32
    %c0_i32_77 = arith.constant 0 : i32
    %157 = tpu.memref_slice %arg2[%c2_i32_74, %c0_i32_77] : memref<16x32xf32, #tpu.memory_space<vmem>> -> memref<1x32xf32, #tpu.memory_space<vmem>>
    %158 = tpu.memref_squeeze %157 : memref<1x32xf32, #tpu.memory_space<vmem>> -> memref<32xf32, #tpu.memory_space<vmem>>
    %c0_i32_78 = arith.constant 0 : i32
    %159 = tpu.memref_slice %arg4[%c0_i32_75, %c0_i32_78] : memref<1032x32xf32, #tpu.memory_space<any>> -> memref<1x32xf32, #tpu.memory_space<any>>
    %160 = tpu.memref_squeeze %159 : memref<1x32xf32, #tpu.memory_space<any>> -> memref<32xf32, #tpu.memory_space<any>>
    %161 = tpu.memref_slice %arg5[%c2_i32_76] : memref<16x!tpu.dma_semaphore, #tpu.memory_space<semaphore_mem>> -> memref<1x!tpu.dma_semaphore, #tpu.memory_space<semaphore_mem>>
    %162 = tpu.memref_squeeze %161 : memref<1x!tpu.dma_semaphore, #tpu.memory_space<semaphore_mem>> -> memref<!tpu.dma_semaphore, #tpu.memory_space<semaphore_mem>>
    tpu.wait_dma2 semaphore(%162 : memref<!tpu.dma_semaphore, #tpu.memory_space<semaphore_mem>>) src(%158 : memref<32xf32, #tpu.memory_space<vmem>>) dst(%160 : memref<32xf32, #tpu.memory_space<any>>)
    %c3_i32_79 = arith.constant 3 : i32
    %c0_i32_80 = arith.constant 0 : i32
    %c3_i32_81 = arith.constant 3 : i32
    %c0_i32_82 = arith.constant 0 : i32
    %163 = tpu.memref_slice %arg2[%c3_i32_79, %c0_i32_82] : memref<16x32xf32, #tpu.memory_space<vmem>> -> memref<1x32xf32, #tpu.memory_space<vmem>>
    %164 = tpu.memref_squeeze %163 : memref<1x32xf32, #tpu.memory_space<vmem>> -> memref<32xf32, #tpu.memory_space<vmem>>
    %c0_i32_83 = arith.constant 0 : i32
    %165 = tpu.memref_slice %arg4[%c0_i32_80, %c0_i32_83] : memref<1032x32xf32, #tpu.memory_space<any>> -> memref<1x32xf32, #tpu.memory_space<any>>
    %166 = tpu.memref_squeeze %165 : memref<1x32xf32, #tpu.memory_space<any>> -> memref<32xf32, #tpu.memory_space<any>>
    %167 = tpu.memref_slice %arg5[%c3_i32_81] : memref<16x!tpu.dma_semaphore, #tpu.memory_space<semaphore_mem>> -> memref<1x!tpu.dma_semaphore, #tpu.memory_space<semaphore_mem>>
    %168 = tpu.memref_squeeze %167 : memref<1x!tpu.dma_semaphore, #tpu.memory_space<semaphore_mem>> -> memref<!tpu.dma_semaphore, #tpu.memory_space<semaphore_mem>>
    tpu.wait_dma2 semaphore(%168 : memref<!tpu.dma_semaphore, #tpu.memory_space<semaphore_mem>>) src(%164 : memref<32xf32, #tpu.memory_space<vmem>>) dst(%166 : memref<32xf32, #tpu.memory_space<any>>)
    %c4_i32_84 = arith.constant 4 : i32
    %c0_i32_85 = arith.constant 0 : i32
    %c4_i32_86 = arith.constant 4 : i32
    %c0_i32_87 = arith.constant 0 : i32
    %169 = tpu.memref_slice %arg2[%c4_i32_84, %c0_i32_87] : memref<16x32xf32, #tpu.memory_space<vmem>> -> memref<1x32xf32, #tpu.memory_space<vmem>>
    %170 = tpu.memref_squeeze %169 : memref<1x32xf32, #tpu.memory_space<vmem>> -> memref<32xf32, #tpu.memory_space<vmem>>
    %c0_i32_88 = arith.constant 0 : i32
    %171 = tpu.memref_slice %arg4[%c0_i32_85, %c0_i32_88] : memref<1032x32xf32, #tpu.memory_space<any>> -> memref<1x32xf32, #tpu.memory_space<any>>
    %172 = tpu.memref_squeeze %171 : memref<1x32xf32, #tpu.memory_space<any>> -> memref<32xf32, #tpu.memory_space<any>>
    %173 = tpu.memref_slice %arg5[%c4_i32_86] : memref<16x!tpu.dma_semaphore, #tpu.memory_space<semaphore_mem>> -> memref<1x!tpu.dma_semaphore, #tpu.memory_space<semaphore_mem>>
    %174 = tpu.memref_squeeze %173 : memref<1x!tpu.dma_semaphore, #tpu.memory_space<semaphore_mem>> -> memref<!tpu.dma_semaphore, #tpu.memory_space<semaphore_mem>>
    tpu.wait_dma2 semaphore(%174 : memref<!tpu.dma_semaphore, #tpu.memory_space<semaphore_mem>>) src(%170 : memref<32xf32, #tpu.memory_space<vmem>>) dst(%172 : memref<32xf32, #tpu.memory_space<any>>)
    %c5_i32_89 = arith.constant 5 : i32
    %c0_i32_90 = arith.constant 0 : i32
    %c5_i32_91 = arith.constant 5 : i32
    %c0_i32_92 = arith.constant 0 : i32
    %175 = tpu.memref_slice %arg2[%c5_i32_89, %c0_i32_92] : memref<16x32xf32, #tpu.memory_space<vmem>> -> memref<1x32xf32, #tpu.memory_space<vmem>>
    %176 = tpu.memref_squeeze %175 : memref<1x32xf32, #tpu.memory_space<vmem>> -> memref<32xf32, #tpu.memory_space<vmem>>
    %c0_i32_93 = arith.constant 0 : i32
    %177 = tpu.memref_slice %arg4[%c0_i32_90, %c0_i32_93] : memref<1032x32xf32, #tpu.memory_space<any>> -> memref<1x32xf32, #tpu.memory_space<any>>
    %178 = tpu.memref_squeeze %177 : memref<1x32xf32, #tpu.memory_space<any>> -> memref<32xf32, #tpu.memory_space<any>>
    %179 = tpu.memref_slice %arg5[%c5_i32_91] : memref<16x!tpu.dma_semaphore, #tpu.memory_space<semaphore_mem>> -> memref<1x!tpu.dma_semaphore, #tpu.memory_space<semaphore_mem>>
    %180 = tpu.memref_squeeze %179 : memref<1x!tpu.dma_semaphore, #tpu.memory_space<semaphore_mem>> -> memref<!tpu.dma_semaphore, #tpu.memory_space<semaphore_mem>>
    tpu.wait_dma2 semaphore(%180 : memref<!tpu.dma_semaphore, #tpu.memory_space<semaphore_mem>>) src(%176 : memref<32xf32, #tpu.memory_space<vmem>>) dst(%178 : memref<32xf32, #tpu.memory_space<any>>)
    %c6_i32_94 = arith.constant 6 : i32
    %c0_i32_95 = arith.constant 0 : i32
    %c6_i32_96 = arith.constant 6 : i32
    %c0_i32_97 = arith.constant 0 : i32
    %181 = tpu.memref_slice %arg2[%c6_i32_94, %c0_i32_97] : memref<16x32xf32, #tpu.memory_space<vmem>> -> memref<1x32xf32, #tpu.memory_space<vmem>>
    %182 = tpu.memref_squeeze %181 : memref<1x32xf32, #tpu.memory_space<vmem>> -> memref<32xf32, #tpu.memory_space<vmem>>
    %c0_i32_98 = arith.constant 0 : i32
    %183 = tpu.memref_slice %arg4[%c0_i32_95, %c0_i32_98] : memref<1032x32xf32, #tpu.memory_space<any>> -> memref<1x32xf32, #tpu.memory_space<any>>
    %184 = tpu.memref_squeeze %183 : memref<1x32xf32, #tpu.memory_space<any>> -> memref<32xf32, #tpu.memory_space<any>>
    %185 = tpu.memref_slice %arg5[%c6_i32_96] : memref<16x!tpu.dma_semaphore, #tpu.memory_space<semaphore_mem>> -> memref<1x!tpu.dma_semaphore, #tpu.memory_space<semaphore_mem>>
    %186 = tpu.memref_squeeze %185 : memref<1x!tpu.dma_semaphore, #tpu.memory_space<semaphore_mem>> -> memref<!tpu.dma_semaphore, #tpu.memory_space<semaphore_mem>>
    tpu.wait_dma2 semaphore(%186 : memref<!tpu.dma_semaphore, #tpu.memory_space<semaphore_mem>>) src(%182 : memref<32xf32, #tpu.memory_space<vmem>>) dst(%184 : memref<32xf32, #tpu.memory_space<any>>)
    %c7_i32_99 = arith.constant 7 : i32
    %c0_i32_100 = arith.constant 0 : i32
    %c7_i32_101 = arith.constant 7 : i32
    %c0_i32_102 = arith.constant 0 : i32
    %187 = tpu.memref_slice %arg2[%c7_i32_99, %c0_i32_102] : memref<16x32xf32, #tpu.memory_space<vmem>> -> memref<1x32xf32, #tpu.memory_space<vmem>>
    %188 = tpu.memref_squeeze %187 : memref<1x32xf32, #tpu.memory_space<vmem>> -> memref<32xf32, #tpu.memory_space<vmem>>
    %c0_i32_103 = arith.constant 0 : i32
    %189 = tpu.memref_slice %arg4[%c0_i32_100, %c0_i32_103] : memref<1032x32xf32, #tpu.memory_space<any>> -> memref<1x32xf32, #tpu.memory_space<any>>
    %190 = tpu.memref_squeeze %189 : memref<1x32xf32, #tpu.memory_space<any>> -> memref<32xf32, #tpu.memory_space<any>>
    %191 = tpu.memref_slice %arg5[%c7_i32_101] : memref<16x!tpu.dma_semaphore, #tpu.memory_space<semaphore_mem>> -> memref<1x!tpu.dma_semaphore, #tpu.memory_space<semaphore_mem>>
    %192 = tpu.memref_squeeze %191 : memref<1x!tpu.dma_semaphore, #tpu.memory_space<semaphore_mem>> -> memref<!tpu.dma_semaphore, #tpu.memory_space<semaphore_mem>>
    tpu.wait_dma2 semaphore(%192 : memref<!tpu.dma_semaphore, #tpu.memory_space<semaphore_mem>>) src(%188 : memref<32xf32, #tpu.memory_space<vmem>>) dst(%190 : memref<32xf32, #tpu.memory_space<any>>)
    %c8_i32_104 = arith.constant 8 : i32
    %c0_i32_105 = arith.constant 0 : i32
    %c8_i32_106 = arith.constant 8 : i32
    %c0_i32_107 = arith.constant 0 : i32
    %193 = tpu.memref_slice %arg2[%c8_i32_104, %c0_i32_107] : memref<16x32xf32, #tpu.memory_space<vmem>> -> memref<1x32xf32, #tpu.memory_space<vmem>>
    %194 = tpu.memref_squeeze %193 : memref<1x32xf32, #tpu.memory_space<vmem>> -> memref<32xf32, #tpu.memory_space<vmem>>
    %c0_i32_108 = arith.constant 0 : i32
    %195 = tpu.memref_slice %arg4[%c0_i32_105, %c0_i32_108] : memref<1032x32xf32, #tpu.memory_space<any>> -> memref<1x32xf32, #tpu.memory_space<any>>
    %196 = tpu.memref_squeeze %195 : memref<1x32xf32, #tpu.memory_space<any>> -> memref<32xf32, #tpu.memory_space<any>>
    %197 = tpu.memref_slice %arg5[%c8_i32_106] : memref<16x!tpu.dma_semaphore, #tpu.memory_space<semaphore_mem>> -> memref<1x!tpu.dma_semaphore, #tpu.memory_space<semaphore_mem>>
    %198 = tpu.memref_squeeze %197 : memref<1x!tpu.dma_semaphore, #tpu.memory_space<semaphore_mem>> -> memref<!tpu.dma_semaphore, #tpu.memory_space<semaphore_mem>>
    tpu.wait_dma2 semaphore(%198 : memref<!tpu.dma_semaphore, #tpu.memory_space<semaphore_mem>>) src(%194 : memref<32xf32, #tpu.memory_space<vmem>>) dst(%196 : memref<32xf32, #tpu.memory_space<any>>)
    %c9_i32_109 = arith.constant 9 : i32
    %c0_i32_110 = arith.constant 0 : i32
    %c9_i32_111 = arith.constant 9 : i32
    %c0_i32_112 = arith.constant 0 : i32
    %199 = tpu.memref_slice %arg2[%c9_i32_109, %c0_i32_112] : memref<16x32xf32, #tpu.memory_space<vmem>> -> memref<1x32xf32, #tpu.memory_space<vmem>>
    %200 = tpu.memref_squeeze %199 : memref<1x32xf32, #tpu.memory_space<vmem>> -> memref<32xf32, #tpu.memory_space<vmem>>
    %c0_i32_113 = arith.constant 0 : i32
    %201 = tpu.memref_slice %arg4[%c0_i32_110, %c0_i32_113] : memref<1032x32xf32, #tpu.memory_space<any>> -> memref<1x32xf32, #tpu.memory_space<any>>
    %202 = tpu.memref_squeeze %201 : memref<1x32xf32, #tpu.memory_space<any>> -> memref<32xf32, #tpu.memory_space<any>>
    %203 = tpu.memref_slice %arg5[%c9_i32_111] : memref<16x!tpu.dma_semaphore, #tpu.memory_space<semaphore_mem>> -> memref<1x!tpu.dma_semaphore, #tpu.memory_space<semaphore_mem>>
    %204 = tpu.memref_squeeze %203 : memref<1x!tpu.dma_semaphore, #tpu.memory_space<semaphore_mem>> -> memref<!tpu.dma_semaphore, #tpu.memory_space<semaphore_mem>>
    tpu.wait_dma2 semaphore(%204 : memref<!tpu.dma_semaphore, #tpu.memory_space<semaphore_mem>>) src(%200 : memref<32xf32, #tpu.memory_space<vmem>>) dst(%202 : memref<32xf32, #tpu.memory_space<any>>)
    %c10_i32_114 = arith.constant 10 : i32
    %c0_i32_115 = arith.constant 0 : i32
    %c10_i32_116 = arith.constant 10 : i32
    %c0_i32_117 = arith.constant 0 : i32
    %205 = tpu.memref_slice %arg2[%c10_i32_114, %c0_i32_117] : memref<16x32xf32, #tpu.memory_space<vmem>> -> memref<1x32xf32, #tpu.memory_space<vmem>>
    %206 = tpu.memref_squeeze %205 : memref<1x32xf32, #tpu.memory_space<vmem>> -> memref<32xf32, #tpu.memory_space<vmem>>
    %c0_i32_118 = arith.constant 0 : i32
    %207 = tpu.memref_slice %arg4[%c0_i32_115, %c0_i32_118] : memref<1032x32xf32, #tpu.memory_space<any>> -> memref<1x32xf32, #tpu.memory_space<any>>
    %208 = tpu.memref_squeeze %207 : memref<1x32xf32, #tpu.memory_space<any>> -> memref<32xf32, #tpu.memory_space<any>>
    %209 = tpu.memref_slice %arg5[%c10_i32_116] : memref<16x!tpu.dma_semaphore, #tpu.memory_space<semaphore_mem>> -> memref<1x!tpu.dma_semaphore, #tpu.memory_space<semaphore_mem>>
    %210 = tpu.memref_squeeze %209 : memref<1x!tpu.dma_semaphore, #tpu.memory_space<semaphore_mem>> -> memref<!tpu.dma_semaphore, #tpu.memory_space<semaphore_mem>>
    tpu.wait_dma2 semaphore(%210 : memref<!tpu.dma_semaphore, #tpu.memory_space<semaphore_mem>>) src(%206 : memref<32xf32, #tpu.memory_space<vmem>>) dst(%208 : memref<32xf32, #tpu.memory_space<any>>)
    %c11_i32_119 = arith.constant 11 : i32
    %c0_i32_120 = arith.constant 0 : i32
    %c11_i32_121 = arith.constant 11 : i32
    %c0_i32_122 = arith.constant 0 : i32
    %211 = tpu.memref_slice %arg2[%c11_i32_119, %c0_i32_122] : memref<16x32xf32, #tpu.memory_space<vmem>> -> memref<1x32xf32, #tpu.memory_space<vmem>>
    %212 = tpu.memref_squeeze %211 : memref<1x32xf32, #tpu.memory_space<vmem>> -> memref<32xf32, #tpu.memory_space<vmem>>
    %c0_i32_123 = arith.constant 0 : i32
    %213 = tpu.memref_slice %arg4[%c0_i32_120, %c0_i32_123] : memref<1032x32xf32, #tpu.memory_space<any>> -> memref<1x32xf32, #tpu.memory_space<any>>
    %214 = tpu.memref_squeeze %213 : memref<1x32xf32, #tpu.memory_space<any>> -> memref<32xf32, #tpu.memory_space<any>>
    %215 = tpu.memref_slice %arg5[%c11_i32_121] : memref<16x!tpu.dma_semaphore, #tpu.memory_space<semaphore_mem>> -> memref<1x!tpu.dma_semaphore, #tpu.memory_space<semaphore_mem>>
    %216 = tpu.memref_squeeze %215 : memref<1x!tpu.dma_semaphore, #tpu.memory_space<semaphore_mem>> -> memref<!tpu.dma_semaphore, #tpu.memory_space<semaphore_mem>>
    tpu.wait_dma2 semaphore(%216 : memref<!tpu.dma_semaphore, #tpu.memory_space<semaphore_mem>>) src(%212 : memref<32xf32, #tpu.memory_space<vmem>>) dst(%214 : memref<32xf32, #tpu.memory_space<any>>)
    %c12_i32_124 = arith.constant 12 : i32
    %c0_i32_125 = arith.constant 0 : i32
    %c12_i32_126 = arith.constant 12 : i32
    %c0_i32_127 = arith.constant 0 : i32
    %217 = tpu.memref_slice %arg2[%c12_i32_124, %c0_i32_127] : memref<16x32xf32, #tpu.memory_space<vmem>> -> memref<1x32xf32, #tpu.memory_space<vmem>>
    %218 = tpu.memref_squeeze %217 : memref<1x32xf32, #tpu.memory_space<vmem>> -> memref<32xf32, #tpu.memory_space<vmem>>
    %c0_i32_128 = arith.constant 0 : i32
    %219 = tpu.memref_slice %arg4[%c0_i32_125, %c0_i32_128] : memref<1032x32xf32, #tpu.memory_space<any>> -> memref<1x32xf32, #tpu.memory_space<any>>
    %220 = tpu.memref_squeeze %219 : memref<1x32xf32, #tpu.memory_space<any>> -> memref<32xf32, #tpu.memory_space<any>>
    %221 = tpu.memref_slice %arg5[%c12_i32_126] : memref<16x!tpu.dma_semaphore, #tpu.memory_space<semaphore_mem>> -> memref<1x!tpu.dma_semaphore, #tpu.memory_space<semaphore_mem>>
    %222 = tpu.memref_squeeze %221 : memref<1x!tpu.dma_semaphore, #tpu.memory_space<semaphore_mem>> -> memref<!tpu.dma_semaphore, #tpu.memory_space<semaphore_mem>>
    tpu.wait_dma2 semaphore(%222 : memref<!tpu.dma_semaphore, #tpu.memory_space<semaphore_mem>>) src(%218 : memref<32xf32, #tpu.memory_space<vmem>>) dst(%220 : memref<32xf32, #tpu.memory_space<any>>)
    %c13_i32_129 = arith.constant 13 : i32
    %c0_i32_130 = arith.constant 0 : i32
    %c13_i32_131 = arith.constant 13 : i32
    %c0_i32_132 = arith.constant 0 : i32
    %223 = tpu.memref_slice %arg2[%c13_i32_129, %c0_i32_132] : memref<16x32xf32, #tpu.memory_space<vmem>> -> memref<1x32xf32, #tpu.memory_space<vmem>>
    %224 = tpu.memref_squeeze %223 : memref<1x32xf32, #tpu.memory_space<vmem>> -> memref<32xf32, #tpu.memory_space<vmem>>
    %c0_i32_133 = arith.constant 0 : i32
    %225 = tpu.memref_slice %arg4[%c0_i32_130, %c0_i32_133] : memref<1032x32xf32, #tpu.memory_space<any>> -> memref<1x32xf32, #tpu.memory_space<any>>
    %226 = tpu.memref_squeeze %225 : memref<1x32xf32, #tpu.memory_space<any>> -> memref<32xf32, #tpu.memory_space<any>>
    %227 = tpu.memref_slice %arg5[%c13_i32_131] : memref<16x!tpu.dma_semaphore, #tpu.memory_space<semaphore_mem>> -> memref<1x!tpu.dma_semaphore, #tpu.memory_space<semaphore_mem>>
    %228 = tpu.memref_squeeze %227 : memref<1x!tpu.dma_semaphore, #tpu.memory_space<semaphore_mem>> -> memref<!tpu.dma_semaphore, #tpu.memory_space<semaphore_mem>>
    tpu.wait_dma2 semaphore(%228 : memref<!tpu.dma_semaphore, #tpu.memory_space<semaphore_mem>>) src(%224 : memref<32xf32, #tpu.memory_space<vmem>>) dst(%226 : memref<32xf32, #tpu.memory_space<any>>)
    %c14_i32_134 = arith.constant 14 : i32
    %c0_i32_135 = arith.constant 0 : i32
    %c14_i32_136 = arith.constant 14 : i32
    %c0_i32_137 = arith.constant 0 : i32
    %229 = tpu.memref_slice %arg2[%c14_i32_134, %c0_i32_137] : memref<16x32xf32, #tpu.memory_space<vmem>> -> memref<1x32xf32, #tpu.memory_space<vmem>>
    %230 = tpu.memref_squeeze %229 : memref<1x32xf32, #tpu.memory_space<vmem>> -> memref<32xf32, #tpu.memory_space<vmem>>
    %c0_i32_138 = arith.constant 0 : i32
    %231 = tpu.memref_slice %arg4[%c0_i32_135, %c0_i32_138] : memref<1032x32xf32, #tpu.memory_space<any>> -> memref<1x32xf32, #tpu.memory_space<any>>
    %232 = tpu.memref_squeeze %231 : memref<1x32xf32, #tpu.memory_space<any>> -> memref<32xf32, #tpu.memory_space<any>>
    %233 = tpu.memref_slice %arg5[%c14_i32_136] : memref<16x!tpu.dma_semaphore, #tpu.memory_space<semaphore_mem>> -> memref<1x!tpu.dma_semaphore, #tpu.memory_space<semaphore_mem>>
    %234 = tpu.memref_squeeze %233 : memref<1x!tpu.dma_semaphore, #tpu.memory_space<semaphore_mem>> -> memref<!tpu.dma_semaphore, #tpu.memory_space<semaphore_mem>>
    tpu.wait_dma2 semaphore(%234 : memref<!tpu.dma_semaphore, #tpu.memory_space<semaphore_mem>>) src(%230 : memref<32xf32, #tpu.memory_space<vmem>>) dst(%232 : memref<32xf32, #tpu.memory_space<any>>)
    %c15_i32_139 = arith.constant 15 : i32
    %c0_i32_140 = arith.constant 0 : i32
    %c15_i32_141 = arith.constant 15 : i32
    %c0_i32_142 = arith.constant 0 : i32
    %235 = tpu.memref_slice %arg2[%c15_i32_139, %c0_i32_142] : memref<16x32xf32, #tpu.memory_space<vmem>> -> memref<1x32xf32, #tpu.memory_space<vmem>>
    %236 = tpu.memref_squeeze %235 : memref<1x32xf32, #tpu.memory_space<vmem>> -> memref<32xf32, #tpu.memory_space<vmem>>
    %c0_i32_143 = arith.constant 0 : i32
    %237 = tpu.memref_slice %arg4[%c0_i32_140, %c0_i32_143] : memref<1032x32xf32, #tpu.memory_space<any>> -> memref<1x32xf32, #tpu.memory_space<any>>
    %238 = tpu.memref_squeeze %237 : memref<1x32xf32, #tpu.memory_space<any>> -> memref<32xf32, #tpu.memory_space<any>>
    %239 = tpu.memref_slice %arg5[%c15_i32_141] : memref<16x!tpu.dma_semaphore, #tpu.memory_space<semaphore_mem>> -> memref<1x!tpu.dma_semaphore, #tpu.memory_space<semaphore_mem>>
    %240 = tpu.memref_squeeze %239 : memref<1x!tpu.dma_semaphore, #tpu.memory_space<semaphore_mem>> -> memref<!tpu.dma_semaphore, #tpu.memory_space<semaphore_mem>>
    tpu.wait_dma2 semaphore(%240 : memref<!tpu.dma_semaphore, #tpu.memory_space<semaphore_mem>>) src(%236 : memref<32xf32, #tpu.memory_space<vmem>>) dst(%238 : memref<32xf32, #tpu.memory_space<any>>)
    return
  }
  func.func @transform_0(%arg0: i32, %arg1: memref<64xi32, #tpu.memory_space<smem>>) -> (i32, i32) {
    %c0_i32 = arith.constant 0 : i32
    %c0_i32_0 = arith.constant 0 : i32
    return %arg0, %c0_i32 : i32, i32
  }
}

</mosaic_0001>

<llo_original>
// kernel: sparse_to_dense_bev.1
$region0: #{sparse_to_dense_bev.1}
  #allocation0 [shape = 'u32[]', space=smem, size = 0x4, offset = 0x4, fixed_abs, tag = 'smem constant byte address 0x4 - core index']
  #allocation1 [shape = 'u32[144,128]{1,0:T(1,128)}', space=vmem, size = 0x12000, scoped, tag = 'internal scratch']
  #allocation2 [shape = 's32[16]{0}', space=sflag, size = 0x40, scoped, tag = 'scratch operand']
  #allocation3 [shape = 's32[1]{0}', space=sflag, size = 0x4, scoped, tag = 'scoped memory for sparse_to_dense_bev.1']
  #allocation4 [shape = 'u8[512]{0}', space=smem, size = 0x200, scoped, tag = 'prefetched SMEM operand 0']
  #allocation5 [shape = 's32[]', space=sflag, size = 0x4, offset = 0, fixed_abs, tag = 'sflag constant byte address 0x0 - dummy sync flag']
  #allocation6 [shape = 's32[]', space=sflag, size = 0x4, offset = 0, fixed_abs, tag = 'sflag constant byte address 0x0 - dummy sync flag']
  #allocation7 [shape = 's32[]', space=sflag, size = 0x4, offset = 0, fixed_abs, tag = 'sflag constant byte address 0x0 - dummy sync flag']
  #allocation8 [shape = 's32[]', space=sflag, size = 0x4, offset = 0, fixed_abs, tag = 'sflag constant byte address 0x0 - dummy sync flag']
  #allocation9 [shape = 's32[]', space=sflag, size = 0x4, offset = 0, fixed_abs, tag = 'sflag constant byte address 0x0 - dummy sync flag']
  #allocation10 [shape = 's32[]', space=sflag, size = 0x4, offset = 0, fixed_abs, tag = 'sflag constant byte address 0x0 - dummy sync flag']
  #allocation11 [shape = 's32[]', space=sflag, size = 0x4, offset = 0, fixed_abs, tag = 'sflag constant byte address 0x0 - dummy sync flag']
  #allocation12 [shape = 's32[]', space=sflag, size = 0x4, offset = 0, fixed_abs, tag = 'sflag constant byte address 0x0 - dummy sync flag']
  #allocation13 [shape = 's32[]', space=sflag, size = 0x4, offset = 0, fixed_abs, tag = 'sflag constant byte address 0x0 - dummy sync flag']
  #allocation14 [shape = 's32[]', space=sflag, size = 0x4, offset = 0, fixed_abs, tag = 'sflag constant byte address 0x0 - dummy sync flag']
  #allocation15 [shape = 's32[]', space=sflag, size = 0x4, offset = 0, fixed_abs, tag = 'sflag constant byte address 0x0 - dummy sync flag']
  #allocation16 [shape = 's32[]', space=sflag, size = 0x4, offset = 0, fixed_abs, tag = 'sflag constant byte address 0x0 - dummy sync flag']
  #allocation17 [shape = 's32[]', space=sflag, size = 0x4, offset = 0, fixed_abs, tag = 'sflag constant byte address 0x0 - dummy sync flag']
  #allocation18 [shape = 's32[]', space=sflag, size = 0x4, offset = 0, fixed_abs, tag = 'sflag constant byte address 0x0 - dummy sync flag']
  #allocation19 [shape = 's32[]', space=sflag, size = 0x4, offset = 0, fixed_abs, tag = 'sflag constant byte address 0x0 - dummy sync flag']
  #allocation20 [shape = 's32[]', space=sflag, size = 0x4, offset = 0, fixed_abs, tag = 'sflag constant byte address 0x0 - dummy sync flag']
  %s0 = inlined_call_operand.vmem [shape: s32[64], index: 0, kind: input, shape index: {}]
  %s1 = inlined_call_operand.vmem [shape: f32[64,32], index: 1, kind: input, shape index: {}]
  %s2 = inlined_call_operand.vmem [shape: f32[1032,32], index: 2, kind: input, shape index: {}, may-alias: {2,3}]
  %s3 = inlined_call_operand.vmem [shape: f32[1032,32], index: 3, kind: output, shape index: {}, may-alias: {2,3}]
  %s4 = sld [smem:[#allocation0]]
  $region505: #{sparse_to_dense_bev.1} parent=0
    _
  %s6 = ssub.s32 1, %s4
  %s7 = scalar_select 0, %s6, %s4
  %s8 = sshll.u32 %s0, 4
  %s9 = int_to_ptr.vmem [resolvable:$true] %s8
  %11 = dma.vmem_to_smem %s9, 16, [#allocation4], [#allocation3]
  %12 = dma.done [#allocation3], 16
  %13 = sfence
  loop: start=0, step=1, limit=5
  $region2: #{sparse_to_dense_bev.1} parent=0 // loop_pre_header
    _
  $region3: #{sparse_to_dense_bev.1} parent=0 // loop_header
    %s15 = sphi 0, %s19
    %p16 = scmp.ge.s32.totalorder %s15, 5
    %s24 = sphi 0, %s26
    %s27 = sphi 0, %s24
    %s37 = sphi 0, %s27
  $region4: #{sparse_to_dense_bev.1} parent=0 // loop_header_branch
    %18 = sbr.rel (%p16) target = $region8
  $region5: #{sparse_to_dense_bev.1} parent=0 // loop_body
    %s20 = ssub.s32 %s15, 1
    %s21 = sadd.s32 %s15, 1
    %s22 = ssub.s32 %s15, %s21
    %p23 = scmp.eq.s32.totalorder %s22, 0
    %s25 = sadd.s32 %s24, 1
    %s26 = scalar_select %p23, %s24, %s25
    %p28 = pneg %p23
    %p29 = scmp.eq.s32.totalorder %s15, 3
    %p30 = por %p28, %p29
    %p31 = scmp.ne.s32.totalorder %s24, %s27
    %p32 = scmp.eq.s32.totalorder %s15, 0
    %p33 = por %p31, %p32
    %p34 = scmp.ne.s32.totalorder %s24, %s27
    %p35 = scmp.eq.s32.totalorder %s20, 3
    %p36 = por %p34, %p35
    %p38 = scmp.ne.s32.totalorder %s27, %s37
    %p39 = scmp.eq.s32.totalorder %s20, 0
    %p40 = por %p38, %p39
    %p41 = scmp.le.s32.totalorder 1, %s15
    // Predicated region
    $region9: #{sparse_to_dense_bev.1} parent=5 // pred_check
      %p42 = pneg %p41
    $region10: #{sparse_to_dense_bev.1} parent=5 // pred_check_branch
      %44 = sbr.rel (%p42) target = $region12
    $region11: #{sparse_to_dense_bev.1} parent=5 // pred_region
      %s45 = ssub.s32 %s15, 1
    $region12: #{sparse_to_dense_bev.1} parent=5 // pred_fallthru
      _
    %p46 = scmp.lt.s32.totalorder %s15, 4
    // Predicated region
    $region13: #{sparse_to_dense_bev.1} parent=5 // pred_check
      %p47 = pneg %p46
    $region14: #{sparse_to_dense_bev.1} parent=5 // pred_check_branch
      %49 = sbr.rel (%p47) target = $region16
    $region15: #{sparse_to_dense_bev.1} parent=5 // pred_region
      // Predicated region
      $region17: #{sparse_to_dense_bev.1} parent=15 // pred_check
        %p50 = pneg %p33
      $region18: #{sparse_to_dense_bev.1} parent=15 // pred_check_branch
        %52 = sbr.rel (%p50) target = $region20
      $region19: #{sparse_to_dense_bev.1} parent=15 // pred_region
        %s53 = smul.u32 2, %s15
        %p54 = scmp.lt.s32.totalorder %s53, 7
        %s55 = scalar_select %p54, %s53, 7
        %s56 = smul.addr %s55, 8
        %s57 = scalar_lea.vmem %s1, %s56
        %s58 = smul.u32 2, %s15
      $region20: #{sparse_to_dense_bev.1} parent=15 // pred_fallthru
        _
    $region16: #{sparse_to_dense_bev.1} parent=5 // pred_fallthru
      _
    %p59 = scmp.le.s32.totalorder 1, %s15
    // Predicated region
    $region21: #{sparse_to_dense_bev.1} parent=5 // pred_check
      %p60 = pneg %p59
    $region22: #{sparse_to_dense_bev.1} parent=5 // pred_check_branch
      %62 = sbr.rel (%p60) target = $region24
    $region23: #{sparse_to_dense_bev.1} parent=5 // pred_region
      %s63 = ssub.s32 %s15, 1
      %s64 = smul.u32 2, %s20
      %p65 = scmp.lt.s32.totalorder %s64, 7
      %s66 = scalar_select %p65, %s64, 7
      %s67 = smul.addr %s66, 8
      %s68 = scalar_lea.vmem %s1, %s67
      %p69 = pneg %p40
      %p70 = pneg %p36
      %s71 = smul.u32 2, %s20
      %p72 = scmp.lt.s32.totalorder %s71, 7
      %s73 = scalar_select %p72, %s71, 7
      %s74 = smul.addr %s73, 8
      %s75 = scalar_lea.vmem %s1, %s74
      %s76 = smul.u32 2, %s20
      %s77 = smul.u32 %s20, 16
      %s78 = sld [smem:[#allocation4 + %s77]]
      %s79 = scalar_lea.vmem %s3, %s78
      %p81 = scmp.lt.u32.totalorder 1, 8
      %p82 = pneg %p81
      // Predicated region
      $region25: #{sparse_to_dense_bev.1} parent=23 // pred_check
        _
      $region26: #{sparse_to_dense_bev.1} parent=23 // pred_check_branch
        %84 = sbr.rel (%p81) target = $region28
      $region27: #{sparse_to_dense_bev.1} parent=23 // pred_region
        %s99 = sand.u32 1, 7
        %p100 = scmp.eq.s32.totalorder %s99, 0
        %p101 = pneg %p100
        // Predicated region
        $region40: #{sparse_to_dense_bev.1} parent=27 // pred_check
          _
        $region41: #{sparse_to_dense_bev.1} parent=27 // pred_check_branch
          %103 = sbr.rel (%p100) target = $region43
        $region42: #{sparse_to_dense_bev.1} parent=27 // pred_region
          %s104 = sand.u32 1, 7
          %s105 = ssub.s32 1, %s104
          %s106 = scalar_lea.vmem %s75, %s105
          %s107 = ssub.s32 1, %s104
          %s108 = scalar_lea.vmem %s79, %s107
          %s109 = sshllo.u32 0, %s104
          loop: start=0, step=1, limit=1
          $region44: #{sparse_to_dense_bev.1} parent=42 // loop_pre_header
            _
          $region45: #{sparse_to_dense_bev.1} parent=42 // loop_header
            %s111 = sphi 0, %s115
            %p112 = scmp.ge.s32.totalorder %s111, 1
            %s116 = sphi %s106, %s106
            %s117 = sphi %s108, %s108
          $region46: #{sparse_to_dense_bev.1} parent=42 // loop_header_branch
            %114 = sbr.rel (%p112) target = $region50
          $region47: #{sparse_to_dense_bev.1} parent=42 // loop_body
            %v118 = vld [vmem:[%s116] sm:%s109]
            %119 = vst [vmem:[%s117] sm:%s109] %v118
          $region48: #{sparse_to_dense_bev.1} parent=42 // loop_footer
            %s115 = sadd.s32 1, %s111
          $region49: #{sparse_to_dense_bev.1} parent=42 // loop_footer_branch
            %110 = sbr.rel target = $region45
          $region50: #{sparse_to_dense_bev.1} parent=42 // loop_exit
            _
        $region43: #{sparse_to_dense_bev.1} parent=27 // pred_fallthru
          _
      $region28: #{sparse_to_dense_bev.1} parent=23 // pred_fallthru
        _
      // Predicated region
      $region29: #{sparse_to_dense_bev.1} parent=23 // pred_check
        %p85 = pneg %p81
      $region30: #{sparse_to_dense_bev.1} parent=23 // pred_check_branch
        %87 = sbr.rel (%p85) target = $region32
      $region31: #{sparse_to_dense_bev.1} parent=23 // pred_region
        %s88 = sshllo.u32 0, 1
        loop: start=0, step=1, limit=1
        $region33: #{sparse_to_dense_bev.1} parent=31 // loop_pre_header
          _
        $region34: #{sparse_to_dense_bev.1} parent=31 // loop_header
          %s90 = sphi 0, %s94
          %p91 = scmp.ge.s32.totalorder %s90, 1
          %s95 = sphi %s75, %s75
          %s96 = sphi %s79, %s79
        $region35: #{sparse_to_dense_bev.1} parent=31 // loop_header_branch
          %93 = sbr.rel (%p91) target = $region39
        $region36: #{sparse_to_dense_bev.1} parent=31 // loop_body
          %v97 = vld [vmem:[%s95] sm:%s88]
          %98 = vst [vmem:[%s96] sm:%s88] %v97
        $region37: #{sparse_to_dense_bev.1} parent=31 // loop_footer
          %s94 = sadd.s32 1, %s90
        $region38: #{sparse_to_dense_bev.1} parent=31 // loop_footer_branch
          %89 = sbr.rel target = $region34
        $region39: #{sparse_to_dense_bev.1} parent=31 // loop_exit
          _
      $region32: #{sparse_to_dense_bev.1} parent=23 // pred_fallthru
        _
      // Predicated region
      $region51: #{sparse_to_dense_bev.1} parent=23 // pred_check
        _
      $region52: #{sparse_to_dense_bev.1} parent=23 // pred_check_branch
        %122 = sbr.rel (0) target = $region54
      $region53: #{sparse_to_dense_bev.1} parent=23 // pred_region
        %123 = vsyncadd [#allocation2], 16
      $region54: #{sparse_to_dense_bev.1} parent=23 // pred_fallthru
        _
      %s124 = sadd.s32 %s77, 1
      %s125 = sld [smem:[#allocation4 + %s124]]
      %s126 = scalar_lea.vmem %s75, 1
      %s127 = scalar_lea.vmem %s3, %s125
      %s128 = scalar_lea.sflag [#allocation2], 1
      %p130 = scmp.lt.u32.totalorder 1, 8
      %p131 = pneg %p130
      // Predicated region
      $region55: #{sparse_to_dense_bev.1} parent=23 // pred_check
        _
      $region56: #{sparse_to_dense_bev.1} parent=23 // pred_check_branch
        %133 = sbr.rel (%p130) target = $region58
      $region57: #{sparse_to_dense_bev.1} parent=23 // pred_region
        %s148 = sand.u32 1, 7
        %p149 = scmp.eq.s32.totalorder %s148, 0
        %p150 = pneg %p149
        // Predicated region
        $region70: #{sparse_to_dense_bev.1} parent=57 // pred_check
          _
        $region71: #{sparse_to_dense_bev.1} parent=57 // pred_check_branch
          %152 = sbr.rel (%p149) target = $region73
        $region72: #{sparse_to_dense_bev.1} parent=57 // pred_region
          %s153 = sand.u32 1, 7
          %s154 = ssub.s32 1, %s153
          %s155 = scalar_lea.vmem %s126, %s154
          %s156 = ssub.s32 1, %s153
          %s157 = scalar_lea.vmem %s127, %s156
          %s158 = sshllo.u32 0, %s153
          loop: start=0, step=1, limit=1
          $region74: #{sparse_to_dense_bev.1} parent=72 // loop_pre_header
            _
          $region75: #{sparse_to_dense_bev.1} parent=72 // loop_header
            %s160 = sphi 0, %s164
            %p161 = scmp.ge.s32.totalorder %s160, 1
            %s165 = sphi %s155, %s155
            %s166 = sphi %s157, %s157
          $region76: #{sparse_to_dense_bev.1} parent=72 // loop_header_branch
            %163 = sbr.rel (%p161) target = $region80
          $region77: #{sparse_to_dense_bev.1} parent=72 // loop_body
            %v167 = vld [vmem:[%s165] sm:%s158]
            %168 = vst [vmem:[%s166] sm:%s158] %v167
          $region78: #{sparse_to_dense_bev.1} parent=72 // loop_footer
            %s164 = sadd.s32 1, %s160
          $region79: #{sparse_to_dense_bev.1} parent=72 // loop_footer_branch
            %159 = sbr.rel target = $region75
          $region80: #{sparse_to_dense_bev.1} parent=72 // loop_exit
            _
        $region73: #{sparse_to_dense_bev.1} parent=57 // pred_fallthru
          _
      $region58: #{sparse_to_dense_bev.1} parent=23 // pred_fallthru
        _
      // Predicated region
      $region59: #{sparse_to_dense_bev.1} parent=23 // pred_check
        %p134 = pneg %p130
      $region60: #{sparse_to_dense_bev.1} parent=23 // pred_check_branch
        %136 = sbr.rel (%p134) target = $region62
      $region61: #{sparse_to_dense_bev.1} parent=23 // pred_region
        %s137 = sshllo.u32 0, 1
        loop: start=0, step=1, limit=1
        $region63: #{sparse_to_dense_bev.1} parent=61 // loop_pre_header
          _
        $region64: #{sparse_to_dense_bev.1} parent=61 // loop_header
          %s139 = sphi 0, %s143
          %p140 = scmp.ge.s32.totalorder %s139, 1
          %s144 = sphi %s126, %s126
          %s145 = sphi %s127, %s127
        $region65: #{sparse_to_dense_bev.1} parent=61 // loop_header_branch
          %142 = sbr.rel (%p140) target = $region69
        $region66: #{sparse_to_dense_bev.1} parent=61 // loop_body
          %v146 = vld [vmem:[%s144] sm:%s137]
          %147 = vst [vmem:[%s145] sm:%s137] %v146
        $region67: #{sparse_to_dense_bev.1} parent=61 // loop_footer
          %s143 = sadd.s32 1, %s139
        $region68: #{sparse_to_dense_bev.1} parent=61 // loop_footer_branch
          %138 = sbr.rel target = $region64
        $region69: #{sparse_to_dense_bev.1} parent=61 // loop_exit
          _
      $region62: #{sparse_to_dense_bev.1} parent=23 // pred_fallthru
        _
      // Predicated region
      $region81: #{sparse_to_dense_bev.1} parent=23 // pred_check
        _
      $region82: #{sparse_to_dense_bev.1} parent=23 // pred_check_branch
        %171 = sbr.rel (0) target = $region84
      $region83: #{sparse_to_dense_bev.1} parent=23 // pred_region
        %172 = vsyncadd %s128, 16
      $region84: #{sparse_to_dense_bev.1} parent=23 // pred_fallthru
        _
      %s173 = sadd.s32 %s77, 2
      %s174 = sld [smem:[#allocation4 + %s173]]
      %s175 = scalar_lea.vmem %s75, 2
      %s176 = scalar_lea.vmem %s3, %s174
      %s177 = scalar_lea.sflag [#allocation2], 2
      %p179 = scmp.lt.u32.totalorder 1, 8
      %p180 = pneg %p179
      // Predicated region
      $region85: #{sparse_to_dense_bev.1} parent=23 // pred_check
        _
      $region86: #{sparse_to_dense_bev.1} parent=23 // pred_check_branch
        %182 = sbr.rel (%p179) target = $region88
      $region87: #{sparse_to_dense_bev.1} parent=23 // pred_region
        %s197 = sand.u32 1, 7
        %p198 = scmp.eq.s32.totalorder %s197, 0
        %p199 = pneg %p198
        // Predicated region
        $region100: #{sparse_to_dense_bev.1} parent=87 // pred_check
          _
        $region101: #{sparse_to_dense_bev.1} parent=87 // pred_check_branch
          %201 = sbr.rel (%p198) target = $region103
        $region102: #{sparse_to_dense_bev.1} parent=87 // pred_region
          %s202 = sand.u32 1, 7
          %s203 = ssub.s32 1, %s202
          %s204 = scalar_lea.vmem %s175, %s203
          %s205 = ssub.s32 1, %s202
          %s206 = scalar_lea.vmem %s176, %s205
          %s207 = sshllo.u32 0, %s202
          loop: start=0, step=1, limit=1
          $region104: #{sparse_to_dense_bev.1} parent=102 // loop_pre_header
            _
          $region105: #{sparse_to_dense_bev.1} parent=102 // loop_header
            %s209 = sphi 0, %s213
            %p210 = scmp.ge.s32.totalorder %s209, 1
            %s214 = sphi %s204, %s204
            %s215 = sphi %s206, %s206
          $region106: #{sparse_to_dense_bev.1} parent=102 // loop_header_branch
            %212 = sbr.rel (%p210) target = $region110
          $region107: #{sparse_to_dense_bev.1} parent=102 // loop_body
            %v216 = vld [vmem:[%s214] sm:%s207]
            %217 = vst [vmem:[%s215] sm:%s207] %v216
          $region108: #{sparse_to_dense_bev.1} parent=102 // loop_footer
            %s213 = sadd.s32 1, %s209
          $region109: #{sparse_to_dense_bev.1} parent=102 // loop_footer_branch
            %208 = sbr.rel target = $region105
          $region110: #{sparse_to_dense_bev.1} parent=102 // loop_exit
            _
        $region103: #{sparse_to_dense_bev.1} parent=87 // pred_fallthru
          _
      $region88: #{sparse_to_dense_bev.1} parent=23 // pred_fallthru
        _
      // Predicated region
      $region89: #{sparse_to_dense_bev.1} parent=23 // pred_check
        %p183 = pneg %p179
      $region90: #{sparse_to_dense_bev.1} parent=23 // pred_check_branch
        %185 = sbr.rel (%p183) target = $region92
      $region91: #{sparse_to_dense_bev.1} parent=23 // pred_region
        %s186 = sshllo.u32 0, 1
        loop: start=0, step=1, limit=1
        $region93: #{sparse_to_dense_bev.1} parent=91 // loop_pre_header
          _
        $region94: #{sparse_to_dense_bev.1} parent=91 // loop_header
          %s188 = sphi 0, %s192
          %p189 = scmp.ge.s32.totalorder %s188, 1
          %s193 = sphi %s175, %s175
          %s194 = sphi %s176, %s176
        $region95: #{sparse_to_dense_bev.1} parent=91 // loop_header_branch
          %191 = sbr.rel (%p189) target = $region99
        $region96: #{sparse_to_dense_bev.1} parent=91 // loop_body
          %v195 = vld [vmem:[%s193] sm:%s186]
          %196 = vst [vmem:[%s194] sm:%s186] %v195
        $region97: #{sparse_to_dense_bev.1} parent=91 // loop_footer
          %s192 = sadd.s32 1, %s188
        $region98: #{sparse_to_dense_bev.1} parent=91 // loop_footer_branch
          %187 = sbr.rel target = $region94
        $region99: #{sparse_to_dense_bev.1} parent=91 // loop_exit
          _
      $region92: #{sparse_to_dense_bev.1} parent=23 // pred_fallthru
        _
      // Predicated region
      $region111: #{sparse_to_dense_bev.1} parent=23 // pred_check
        _
      $region112: #{sparse_to_dense_bev.1} parent=23 // pred_check_branch
        %220 = sbr.rel (0) target = $region114
      $region113: #{sparse_to_dense_bev.1} parent=23 // pred_region
        %221 = vsyncadd %s177, 16
      $region114: #{sparse_to_dense_bev.1} parent=23 // pred_fallthru
        _
      %s222 = sadd.s32 %s77, 3
      %s223 = sld [smem:[#allocation4 + %s222]]
      %s224 = scalar_lea.vmem %s75, 3
      %s225 = scalar_lea.vmem %s3, %s223
      %s226 = scalar_lea.sflag [#allocation2], 3
      %p228 = scmp.lt.u32.totalorder 1, 8
      %p229 = pneg %p228
      // Predicated region
      $region115: #{sparse_to_dense_bev.1} parent=23 // pred_check
        _
      $region116: #{sparse_to_dense_bev.1} parent=23 // pred_check_branch
        %231 = sbr.rel (%p228) target = $region118
      $region117: #{sparse_to_dense_bev.1} parent=23 // pred_region
        %s246 = sand.u32 1, 7
        %p247 = scmp.eq.s32.totalorder %s246, 0
        %p248 = pneg %p247
        // Predicated region
        $region130: #{sparse_to_dense_bev.1} parent=117 // pred_check
          _
        $region131: #{sparse_to_dense_bev.1} parent=117 // pred_check_branch
          %250 = sbr.rel (%p247) target = $region133
        $region132: #{sparse_to_dense_bev.1} parent=117 // pred_region
          %s251 = sand.u32 1, 7
          %s252 = ssub.s32 1, %s251
          %s253 = scalar_lea.vmem %s224, %s252
          %s254 = ssub.s32 1, %s251
          %s255 = scalar_lea.vmem %s225, %s254
          %s256 = sshllo.u32 0, %s251
          loop: start=0, step=1, limit=1
          $region134: #{sparse_to_dense_bev.1} parent=132 // loop_pre_header
            _
          $region135: #{sparse_to_dense_bev.1} parent=132 // loop_header
            %s258 = sphi 0, %s262
            %p259 = scmp.ge.s32.totalorder %s258, 1
            %s263 = sphi %s253, %s253
            %s264 = sphi %s255, %s255
          $region136: #{sparse_to_dense_bev.1} parent=132 // loop_header_branch
            %261 = sbr.rel (%p259) target = $region140
          $region137: #{sparse_to_dense_bev.1} parent=132 // loop_body
            %v265 = vld [vmem:[%s263] sm:%s256]
            %266 = vst [vmem:[%s264] sm:%s256] %v265
          $region138: #{sparse_to_dense_bev.1} parent=132 // loop_footer
            %s262 = sadd.s32 1, %s258
          $region139: #{sparse_to_dense_bev.1} parent=132 // loop_footer_branch
            %257 = sbr.rel target = $region135
          $region140: #{sparse_to_dense_bev.1} parent=132 // loop_exit
            _
        $region133: #{sparse_to_dense_bev.1} parent=117 // pred_fallthru
          _
      $region118: #{sparse_to_dense_bev.1} parent=23 // pred_fallthru
        _
      // Predicated region
      $region119: #{sparse_to_dense_bev.1} parent=23 // pred_check
        %p232 = pneg %p228
      $region120: #{sparse_to_dense_bev.1} parent=23 // pred_check_branch
        %234 = sbr.rel (%p232) target = $region122
      $region121: #{sparse_to_dense_bev.1} parent=23 // pred_region
        %s235 = sshllo.u32 0, 1
        loop: start=0, step=1, limit=1
        $region123: #{sparse_to_dense_bev.1} parent=121 // loop_pre_header
          _
        $region124: #{sparse_to_dense_bev.1} parent=121 // loop_header
          %s237 = sphi 0, %s241
          %p238 = scmp.ge.s32.totalorder %s237, 1
          %s242 = sphi %s224, %s224
          %s243 = sphi %s225, %s225
        $region125: #{sparse_to_dense_bev.1} parent=121 // loop_header_branch
          %240 = sbr.rel (%p238) target = $region129
        $region126: #{sparse_to_dense_bev.1} parent=121 // loop_body
          %v244 = vld [vmem:[%s242] sm:%s235]
          %245 = vst [vmem:[%s243] sm:%s235] %v244
        $region127: #{sparse_to_dense_bev.1} parent=121 // loop_footer
          %s241 = sadd.s32 1, %s237
        $region128: #{sparse_to_dense_bev.1} parent=121 // loop_footer_branch
          %236 = sbr.rel target = $region124
        $region129: #{sparse_to_dense_bev.1} parent=121 // loop_exit
          _
      $region122: #{sparse_to_dense_bev.1} parent=23 // pred_fallthru
        _
      // Predicated region
      $region141: #{sparse_to_dense_bev.1} parent=23 // pred_check
        _
      $region142: #{sparse_to_dense_bev.1} parent=23 // pred_check_branch
        %269 = sbr.rel (0) target = $region144
      $region143: #{sparse_to_dense_bev.1} parent=23 // pred_region
        %270 = vsyncadd %s226, 16
      $region144: #{sparse_to_dense_bev.1} parent=23 // pred_fallthru
        _
      %s271 = sadd.s32 %s77, 4
      %s272 = sld [smem:[#allocation4 + %s271]]
      %s273 = scalar_lea.vmem %s75, 4
      %s274 = scalar_lea.vmem %s3, %s272
      %s275 = scalar_lea.sflag [#allocation2], 4
      %p277 = scmp.lt.u32.totalorder 1, 8
      %p278 = pneg %p277
      // Predicated region
      $region145: #{sparse_to_dense_bev.1} parent=23 // pred_check
        _
      $region146: #{sparse_to_dense_bev.1} parent=23 // pred_check_branch
        %280 = sbr.rel (%p277) target = $region148
      $region147: #{sparse_to_dense_bev.1} parent=23 // pred_region
        %s295 = sand.u32 1, 7
        %p296 = scmp.eq.s32.totalorder %s295, 0
        %p297 = pneg %p296
        // Predicated region
        $region160: #{sparse_to_dense_bev.1} parent=147 // pred_check
          _
        $region161: #{sparse_to_dense_bev.1} parent=147 // pred_check_branch
          %299 = sbr.rel (%p296) target = $region163
        $region162: #{sparse_to_dense_bev.1} parent=147 // pred_region
          %s300 = sand.u32 1, 7
          %s301 = ssub.s32 1, %s300
          %s302 = scalar_lea.vmem %s273, %s301
          %s303 = ssub.s32 1, %s300
          %s304 = scalar_lea.vmem %s274, %s303
          %s305 = sshllo.u32 0, %s300
          loop: start=0, step=1, limit=1
          $region164: #{sparse_to_dense_bev.1} parent=162 // loop_pre_header
            _
          $region165: #{sparse_to_dense_bev.1} parent=162 // loop_header
            %s307 = sphi 0, %s311
            %p308 = scmp.ge.s32.totalorder %s307, 1
            %s312 = sphi %s302, %s302
            %s313 = sphi %s304, %s304
          $region166: #{sparse_to_dense_bev.1} parent=162 // loop_header_branch
            %310 = sbr.rel (%p308) target = $region170
          $region167: #{sparse_to_dense_bev.1} parent=162 // loop_body
            %v314 = vld [vmem:[%s312] sm:%s305]
            %315 = vst [vmem:[%s313] sm:%s305] %v314
          $region168: #{sparse_to_dense_bev.1} parent=162 // loop_footer
            %s311 = sadd.s32 1, %s307
          $region169: #{sparse_to_dense_bev.1} parent=162 // loop_footer_branch
            %306 = sbr.rel target = $region165
          $region170: #{sparse_to_dense_bev.1} parent=162 // loop_exit
            _
        $region163: #{sparse_to_dense_bev.1} parent=147 // pred_fallthru
          _
      $region148: #{sparse_to_dense_bev.1} parent=23 // pred_fallthru
        _
      // Predicated region
      $region149: #{sparse_to_dense_bev.1} parent=23 // pred_check
        %p281 = pneg %p277
      $region150: #{sparse_to_dense_bev.1} parent=23 // pred_check_branch
        %283 = sbr.rel (%p281) target = $region152
      $region151: #{sparse_to_dense_bev.1} parent=23 // pred_region
        %s284 = sshllo.u32 0, 1
        loop: start=0, step=1, limit=1
        $region153: #{sparse_to_dense_bev.1} parent=151 // loop_pre_header
          _
        $region154: #{sparse_to_dense_bev.1} parent=151 // loop_header
          %s286 = sphi 0, %s290
          %p287 = scmp.ge.s32.totalorder %s286, 1
          %s291 = sphi %s273, %s273
          %s292 = sphi %s274, %s274
        $region155: #{sparse_to_dense_bev.1} parent=151 // loop_header_branch
          %289 = sbr.rel (%p287) target = $region159
        $region156: #{sparse_to_dense_bev.1} parent=151 // loop_body
          %v293 = vld [vmem:[%s291] sm:%s284]
          %294 = vst [vmem:[%s292] sm:%s284] %v293
        $region157: #{sparse_to_dense_bev.1} parent=151 // loop_footer
          %s290 = sadd.s32 1, %s286
        $region158: #{sparse_to_dense_bev.1} parent=151 // loop_footer_branch
          %285 = sbr.rel target = $region154
        $region159: #{sparse_to_dense_bev.1} parent=151 // loop_exit
          _
      $region152: #{sparse_to_dense_bev.1} parent=23 // pred_fallthru
        _
      // Predicated region
      $region171: #{sparse_to_dense_bev.1} parent=23 // pred_check
        _
      $region172: #{sparse_to_dense_bev.1} parent=23 // pred_check_branch
        %318 = sbr.rel (0) target = $region174
      $region173: #{sparse_to_dense_bev.1} parent=23 // pred_region
        %319 = vsyncadd %s275, 16
      $region174: #{sparse_to_dense_bev.1} parent=23 // pred_fallthru
        _
      %s320 = sadd.s32 %s77, 5
      %s321 = sld [smem:[#allocation4 + %s320]]
      %s322 = scalar_lea.vmem %s75, 5
      %s323 = scalar_lea.vmem %s3, %s321
      %s324 = scalar_lea.sflag [#allocation2], 5
      %p326 = scmp.lt.u32.totalorder 1, 8
      %p327 = pneg %p326
      // Predicated region
      $region175: #{sparse_to_dense_bev.1} parent=23 // pred_check
        _
      $region176: #{sparse_to_dense_bev.1} parent=23 // pred_check_branch
        %329 = sbr.rel (%p326) target = $region178
      $region177: #{sparse_to_dense_bev.1} parent=23 // pred_region
        %s344 = sand.u32 1, 7
        %p345 = scmp.eq.s32.totalorder %s344, 0
        %p346 = pneg %p345
        // Predicated region
        $region190: #{sparse_to_dense_bev.1} parent=177 // pred_check
          _
        $region191: #{sparse_to_dense_bev.1} parent=177 // pred_check_branch
          %348 = sbr.rel (%p345) target = $region193
        $region192: #{sparse_to_dense_bev.1} parent=177 // pred_region
          %s349 = sand.u32 1, 7
          %s350 = ssub.s32 1, %s349
          %s351 = scalar_lea.vmem %s322, %s350
          %s352 = ssub.s32 1, %s349
          %s353 = scalar_lea.vmem %s323, %s352
          %s354 = sshllo.u32 0, %s349
          loop: start=0, step=1, limit=1
          $region194: #{sparse_to_dense_bev.1} parent=192 // loop_pre_header
            _
          $region195: #{sparse_to_dense_bev.1} parent=192 // loop_header
            %s356 = sphi 0, %s360
            %p357 = scmp.ge.s32.totalorder %s356, 1
            %s361 = sphi %s351, %s351
            %s362 = sphi %s353, %s353
          $region196: #{sparse_to_dense_bev.1} parent=192 // loop_header_branch
            %359 = sbr.rel (%p357) target = $region200
          $region197: #{sparse_to_dense_bev.1} parent=192 // loop_body
            %v363 = vld [vmem:[%s361] sm:%s354]
            %364 = vst [vmem:[%s362] sm:%s354] %v363
          $region198: #{sparse_to_dense_bev.1} parent=192 // loop_footer
            %s360 = sadd.s32 1, %s356
          $region199: #{sparse_to_dense_bev.1} parent=192 // loop_footer_branch
            %355 = sbr.rel target = $region195
          $region200: #{sparse_to_dense_bev.1} parent=192 // loop_exit
            _
        $region193: #{sparse_to_dense_bev.1} parent=177 // pred_fallthru
          _
      $region178: #{sparse_to_dense_bev.1} parent=23 // pred_fallthru
        _
      // Predicated region
      $region179: #{sparse_to_dense_bev.1} parent=23 // pred_check
        %p330 = pneg %p326
      $region180: #{sparse_to_dense_bev.1} parent=23 // pred_check_branch
        %332 = sbr.rel (%p330) target = $region182
      $region181: #{sparse_to_dense_bev.1} parent=23 // pred_region
        %s333 = sshllo.u32 0, 1
        loop: start=0, step=1, limit=1
        $region183: #{sparse_to_dense_bev.1} parent=181 // loop_pre_header
          _
        $region184: #{sparse_to_dense_bev.1} parent=181 // loop_header
          %s335 = sphi 0, %s339
          %p336 = scmp.ge.s32.totalorder %s335, 1
          %s340 = sphi %s322, %s322
          %s341 = sphi %s323, %s323
        $region185: #{sparse_to_dense_bev.1} parent=181 // loop_header_branch
          %338 = sbr.rel (%p336) target = $region189
        $region186: #{sparse_to_dense_bev.1} parent=181 // loop_body
          %v342 = vld [vmem:[%s340] sm:%s333]
          %343 = vst [vmem:[%s341] sm:%s333] %v342
        $region187: #{sparse_to_dense_bev.1} parent=181 // loop_footer
          %s339 = sadd.s32 1, %s335
        $region188: #{sparse_to_dense_bev.1} parent=181 // loop_footer_branch
          %334 = sbr.rel target = $region184
        $region189: #{sparse_to_dense_bev.1} parent=181 // loop_exit
          _
      $region182: #{sparse_to_dense_bev.1} parent=23 // pred_fallthru
        _
      // Predicated region
      $region201: #{sparse_to_dense_bev.1} parent=23 // pred_check
        _
      $region202: #{sparse_to_dense_bev.1} parent=23 // pred_check_branch
        %367 = sbr.rel (0) target = $region204
      $region203: #{sparse_to_dense_bev.1} parent=23 // pred_region
        %368 = vsyncadd %s324, 16
      $region204: #{sparse_to_dense_bev.1} parent=23 // pred_fallthru
        _
      %s369 = sadd.s32 %s77, 6
      %s370 = sld [smem:[#allocation4 + %s369]]
      %s371 = scalar_lea.vmem %s75, 6
      %s372 = scalar_lea.vmem %s3, %s370
      %s373 = scalar_lea.sflag [#allocation2], 6
      %p375 = scmp.lt.u32.totalorder 1, 8
      %p376 = pneg %p375
      // Predicated region
      $region205: #{sparse_to_dense_bev.1} parent=23 // pred_check
        _
      $region206: #{sparse_to_dense_bev.1} parent=23 // pred_check_branch
        %378 = sbr.rel (%p375) target = $region208
      $region207: #{sparse_to_dense_bev.1} parent=23 // pred_region
        %s393 = sand.u32 1, 7
        %p394 = scmp.eq.s32.totalorder %s393, 0
        %p395 = pneg %p394
        // Predicated region
        $region220: #{sparse_to_dense_bev.1} parent=207 // pred_check
          _
        $region221: #{sparse_to_dense_bev.1} parent=207 // pred_check_branch
          %397 = sbr.rel (%p394) target = $region223
        $region222: #{sparse_to_dense_bev.1} parent=207 // pred_region
          %s398 = sand.u32 1, 7
          %s399 = ssub.s32 1, %s398
          %s400 = scalar_lea.vmem %s371, %s399
          %s401 = ssub.s32 1, %s398
          %s402 = scalar_lea.vmem %s372, %s401
          %s403 = sshllo.u32 0, %s398
          loop: start=0, step=1, limit=1
          $region224: #{sparse_to_dense_bev.1} parent=222 // loop_pre_header
            _
          $region225: #{sparse_to_dense_bev.1} parent=222 // loop_header
            %s405 = sphi 0, %s409
            %p406 = scmp.ge.s32.totalorder %s405, 1
            %s410 = sphi %s400, %s400
            %s411 = sphi %s402, %s402
          $region226: #{sparse_to_dense_bev.1} parent=222 // loop_header_branch
            %408 = sbr.rel (%p406) target = $region230
          $region227: #{sparse_to_dense_bev.1} parent=222 // loop_body
            %v412 = vld [vmem:[%s410] sm:%s403]
            %413 = vst [vmem:[%s411] sm:%s403] %v412
          $region228: #{sparse_to_dense_bev.1} parent=222 // loop_footer
            %s409 = sadd.s32 1, %s405
          $region229: #{sparse_to_dense_bev.1} parent=222 // loop_footer_branch
            %404 = sbr.rel target = $region225
          $region230: #{sparse_to_dense_bev.1} parent=222 // loop_exit
            _
        $region223: #{sparse_to_dense_bev.1} parent=207 // pred_fallthru
          _
      $region208: #{sparse_to_dense_bev.1} parent=23 // pred_fallthru
        _
      // Predicated region
      $region209: #{sparse_to_dense_bev.1} parent=23 // pred_check
        %p379 = pneg %p375
      $region210: #{sparse_to_dense_bev.1} parent=23 // pred_check_branch
        %381 = sbr.rel (%p379) target = $region212
      $region211: #{sparse_to_dense_bev.1} parent=23 // pred_region
        %s382 = sshllo.u32 0, 1
        loop: start=0, step=1, limit=1
        $region213: #{sparse_to_dense_bev.1} parent=211 // loop_pre_header
          _
        $region214: #{sparse_to_dense_bev.1} parent=211 // loop_header
          %s384 = sphi 0, %s388
          %p385 = scmp.ge.s32.totalorder %s384, 1
          %s389 = sphi %s371, %s371
          %s390 = sphi %s372, %s372
        $region215: #{sparse_to_dense_bev.1} parent=211 // loop_header_branch
          %387 = sbr.rel (%p385) target = $region219
        $region216: #{sparse_to_dense_bev.1} parent=211 // loop_body
          %v391 = vld [vmem:[%s389] sm:%s382]
          %392 = vst [vmem:[%s390] sm:%s382] %v391
        $region217: #{sparse_to_dense_bev.1} parent=211 // loop_footer
          %s388 = sadd.s32 1, %s384
        $region218: #{sparse_to_dense_bev.1} parent=211 // loop_footer_branch
          %383 = sbr.rel target = $region214
        $region219: #{sparse_to_dense_bev.1} parent=211 // loop_exit
          _
      $region212: #{sparse_to_dense_bev.1} parent=23 // pred_fallthru
        _
      // Predicated region
      $region231: #{sparse_to_dense_bev.1} parent=23 // pred_check
        _
      $region232: #{sparse_to_dense_bev.1} parent=23 // pred_check_branch
        %416 = sbr.rel (0) target = $region234
      $region233: #{sparse_to_dense_bev.1} parent=23 // pred_region
        %417 = vsyncadd %s373, 16
      $region234: #{sparse_to_dense_bev.1} parent=23 // pred_fallthru
        _
      %s418 = sadd.s32 %s77, 7
      %s419 = sld [smem:[#allocation4 + %s418]]
      %s420 = scalar_lea.vmem %s75, 7
      %s421 = scalar_lea.vmem %s3, %s419
      %s422 = scalar_lea.sflag [#allocation2], 7
      %p424 = scmp.lt.u32.totalorder 1, 8
      %p425 = pneg %p424
      // Predicated region
      $region235: #{sparse_to_dense_bev.1} parent=23 // pred_check
        _
      $region236: #{sparse_to_dense_bev.1} parent=23 // pred_check_branch
        %427 = sbr.rel (%p424) target = $region238
      $region237: #{sparse_to_dense_bev.1} parent=23 // pred_region
        %s442 = sand.u32 1, 7
        %p443 = scmp.eq.s32.totalorder %s442, 0
        %p444 = pneg %p443
        // Predicated region
        $region250: #{sparse_to_dense_bev.1} parent=237 // pred_check
          _
        $region251: #{sparse_to_dense_bev.1} parent=237 // pred_check_branch
          %446 = sbr.rel (%p443) target = $region253
        $region252: #{sparse_to_dense_bev.1} parent=237 // pred_region
          %s447 = sand.u32 1, 7
          %s448 = ssub.s32 1, %s447
          %s449 = scalar_lea.vmem %s420, %s448
          %s450 = ssub.s32 1, %s447
          %s451 = scalar_lea.vmem %s421, %s450
          %s452 = sshllo.u32 0, %s447
          loop: start=0, step=1, limit=1
          $region254: #{sparse_to_dense_bev.1} parent=252 // loop_pre_header
            _
          $region255: #{sparse_to_dense_bev.1} parent=252 // loop_header
            %s454 = sphi 0, %s458
            %p455 = scmp.ge.s32.totalorder %s454, 1
            %s459 = sphi %s449, %s449
            %s460 = sphi %s451, %s451
          $region256: #{sparse_to_dense_bev.1} parent=252 // loop_header_branch
            %457 = sbr.rel (%p455) target = $region260
          $region257: #{sparse_to_dense_bev.1} parent=252 // loop_body
            %v461 = vld [vmem:[%s459] sm:%s452]
            %462 = vst [vmem:[%s460] sm:%s452] %v461
          $region258: #{sparse_to_dense_bev.1} parent=252 // loop_footer
            %s458 = sadd.s32 1, %s454
          $region259: #{sparse_to_dense_bev.1} parent=252 // loop_footer_branch
            %453 = sbr.rel target = $region255
          $region260: #{sparse_to_dense_bev.1} parent=252 // loop_exit
            _
        $region253: #{sparse_to_dense_bev.1} parent=237 // pred_fallthru
          _
      $region238: #{sparse_to_dense_bev.1} parent=23 // pred_fallthru
        _
      // Predicated region
      $region239: #{sparse_to_dense_bev.1} parent=23 // pred_check
        %p428 = pneg %p424
      $region240: #{sparse_to_dense_bev.1} parent=23 // pred_check_branch
        %430 = sbr.rel (%p428) target = $region242
      $region241: #{sparse_to_dense_bev.1} parent=23 // pred_region
        %s431 = sshllo.u32 0, 1
        loop: start=0, step=1, limit=1
        $region243: #{sparse_to_dense_bev.1} parent=241 // loop_pre_header
          _
        $region244: #{sparse_to_dense_bev.1} parent=241 // loop_header
          %s433 = sphi 0, %s437
          %p434 = scmp.ge.s32.totalorder %s433, 1
          %s438 = sphi %s420, %s420
          %s439 = sphi %s421, %s421
        $region245: #{sparse_to_dense_bev.1} parent=241 // loop_header_branch
          %436 = sbr.rel (%p434) target = $region249
        $region246: #{sparse_to_dense_bev.1} parent=241 // loop_body
          %v440 = vld [vmem:[%s438] sm:%s431]
          %441 = vst [vmem:[%s439] sm:%s431] %v440
        $region247: #{sparse_to_dense_bev.1} parent=241 // loop_footer
          %s437 = sadd.s32 1, %s433
        $region248: #{sparse_to_dense_bev.1} parent=241 // loop_footer_branch
          %432 = sbr.rel target = $region244
        $region249: #{sparse_to_dense_bev.1} parent=241 // loop_exit
          _
      $region242: #{sparse_to_dense_bev.1} parent=23 // pred_fallthru
        _
      // Predicated region
      $region261: #{sparse_to_dense_bev.1} parent=23 // pred_check
        _
      $region262: #{sparse_to_dense_bev.1} parent=23 // pred_check_branch
        %465 = sbr.rel (0) target = $region264
      $region263: #{sparse_to_dense_bev.1} parent=23 // pred_region
        %466 = vsyncadd %s422, 16
      $region264: #{sparse_to_dense_bev.1} parent=23 // pred_fallthru
        _
      %s467 = sadd.s32 %s77, 8
      %s468 = sld [smem:[#allocation4 + %s467]]
      %s469 = scalar_lea.vmem %s75, 8
      %s470 = scalar_lea.vmem %s3, %s468
      %s471 = scalar_lea.sflag [#allocation2], 8
      %p473 = scmp.lt.u32.totalorder 1, 8
      %p474 = pneg %p473
      // Predicated region
      $region265: #{sparse_to_dense_bev.1} parent=23 // pred_check
        _
      $region266: #{sparse_to_dense_bev.1} parent=23 // pred_check_branch
        %476 = sbr.rel (%p473) target = $region268
      $region267: #{sparse_to_dense_bev.1} parent=23 // pred_region
        %s491 = sand.u32 1, 7
        %p492 = scmp.eq.s32.totalorder %s491, 0
        %p493 = pneg %p492
        // Predicated region
        $region280: #{sparse_to_dense_bev.1} parent=267 // pred_check
          _
        $region281: #{sparse_to_dense_bev.1} parent=267 // pred_check_branch
          %495 = sbr.rel (%p492) target = $region283
        $region282: #{sparse_to_dense_bev.1} parent=267 // pred_region
          %s496 = sand.u32 1, 7
          %s497 = ssub.s32 1, %s496
          %s498 = scalar_lea.vmem %s469, %s497
          %s499 = ssub.s32 1, %s496
          %s500 = scalar_lea.vmem %s470, %s499
          %s501 = sshllo.u32 0, %s496
          loop: start=0, step=1, limit=1
          $region284: #{sparse_to_dense_bev.1} parent=282 // loop_pre_header
            _
          $region285: #{sparse_to_dense_bev.1} parent=282 // loop_header
            %s503 = sphi 0, %s507
            %p504 = scmp.ge.s32.totalorder %s503, 1
            %s508 = sphi %s498, %s498
            %s509 = sphi %s500, %s500
          $region286: #{sparse_to_dense_bev.1} parent=282 // loop_header_branch
            %506 = sbr.rel (%p504) target = $region290
          $region287: #{sparse_to_dense_bev.1} parent=282 // loop_body
            %v510 = vld [vmem:[%s508] sm:%s501]
            %511 = vst [vmem:[%s509] sm:%s501] %v510
          $region288: #{sparse_to_dense_bev.1} parent=282 // loop_footer
            %s507 = sadd.s32 1, %s503
          $region289: #{sparse_to_dense_bev.1} parent=282 // loop_footer_branch
            %502 = sbr.rel target = $region285
          $region290: #{sparse_to_dense_bev.1} parent=282 // loop_exit
            _
        $region283: #{sparse_to_dense_bev.1} parent=267 // pred_fallthru
          _
      $region268: #{sparse_to_dense_bev.1} parent=23 // pred_fallthru
        _
      // Predicated region
      $region269: #{sparse_to_dense_bev.1} parent=23 // pred_check
        %p477 = pneg %p473
      $region270: #{sparse_to_dense_bev.1} parent=23 // pred_check_branch
        %479 = sbr.rel (%p477) target = $region272
      $region271: #{sparse_to_dense_bev.1} parent=23 // pred_region
        %s480 = sshllo.u32 0, 1
        loop: start=0, step=1, limit=1
        $region273: #{sparse_to_dense_bev.1} parent=271 // loop_pre_header
          _
        $region274: #{sparse_to_dense_bev.1} parent=271 // loop_header
          %s482 = sphi 0, %s486
          %p483 = scmp.ge.s32.totalorder %s482, 1
          %s487 = sphi %s469, %s469
          %s488 = sphi %s470, %s470
        $region275: #{sparse_to_dense_bev.1} parent=271 // loop_header_branch
          %485 = sbr.rel (%p483) target = $region279
        $region276: #{sparse_to_dense_bev.1} parent=271 // loop_body
          %v489 = vld [vmem:[%s487] sm:%s480]
          %490 = vst [vmem:[%s488] sm:%s480] %v489
        $region277: #{sparse_to_dense_bev.1} parent=271 // loop_footer
          %s486 = sadd.s32 1, %s482
        $region278: #{sparse_to_dense_bev.1} parent=271 // loop_footer_branch
          %481 = sbr.rel target = $region274
        $region279: #{sparse_to_dense_bev.1} parent=271 // loop_exit
          _
      $region272: #{sparse_to_dense_bev.1} parent=23 // pred_fallthru
        _
      // Predicated region
      $region291: #{sparse_to_dense_bev.1} parent=23 // pred_check
        _
      $region292: #{sparse_to_dense_bev.1} parent=23 // pred_check_branch
        %514 = sbr.rel (0) target = $region294
      $region293: #{sparse_to_dense_bev.1} parent=23 // pred_region
        %515 = vsyncadd %s471, 16
      $region294: #{sparse_to_dense_bev.1} parent=23 // pred_fallthru
        _
      %s516 = sadd.s32 %s77, 9
      %s517 = sld [smem:[#allocation4 + %s516]]
      %s518 = scalar_lea.vmem %s75, 9
      %s519 = scalar_lea.vmem %s3, %s517
      %s520 = scalar_lea.sflag [#allocation2], 9
      %p522 = scmp.lt.u32.totalorder 1, 8
      %p523 = pneg %p522
      // Predicated region
      $region295: #{sparse_to_dense_bev.1} parent=23 // pred_check
        _
      $region296: #{sparse_to_dense_bev.1} parent=23 // pred_check_branch
        %525 = sbr.rel (%p522) target = $region298
      $region297: #{sparse_to_dense_bev.1} parent=23 // pred_region
        %s540 = sand.u32 1, 7
        %p541 = scmp.eq.s32.totalorder %s540, 0
        %p542 = pneg %p541
        // Predicated region
        $region310: #{sparse_to_dense_bev.1} parent=297 // pred_check
          _
        $region311: #{sparse_to_dense_bev.1} parent=297 // pred_check_branch
          %544 = sbr.rel (%p541) target = $region313
        $region312: #{sparse_to_dense_bev.1} parent=297 // pred_region
          %s545 = sand.u32 1, 7
          %s546 = ssub.s32 1, %s545
          %s547 = scalar_lea.vmem %s518, %s546
          %s548 = ssub.s32 1, %s545
          %s549 = scalar_lea.vmem %s519, %s548
          %s550 = sshllo.u32 0, %s545
          loop: start=0, step=1, limit=1
          $region314: #{sparse_to_dense_bev.1} parent=312 // loop_pre_header
            _
          $region315: #{sparse_to_dense_bev.1} parent=312 // loop_header
            %s552 = sphi 0, %s556
            %p553 = scmp.ge.s32.totalorder %s552, 1
            %s557 = sphi %s547, %s547
            %s558 = sphi %s549, %s549
          $region316: #{sparse_to_dense_bev.1} parent=312 // loop_header_branch
            %555 = sbr.rel (%p553) target = $region320
          $region317: #{sparse_to_dense_bev.1} parent=312 // loop_body
            %v559 = vld [vmem:[%s557] sm:%s550]
            %560 = vst [vmem:[%s558] sm:%s550] %v559
          $region318: #{sparse_to_dense_bev.1} parent=312 // loop_footer
            %s556 = sadd.s32 1, %s552
          $region319: #{sparse_to_dense_bev.1} parent=312 // loop_footer_branch
            %551 = sbr.rel target = $region315
          $region320: #{sparse_to_dense_bev.1} parent=312 // loop_exit
            _
        $region313: #{sparse_to_dense_bev.1} parent=297 // pred_fallthru
          _
      $region298: #{sparse_to_dense_bev.1} parent=23 // pred_fallthru
        _
      // Predicated region
      $region299: #{sparse_to_dense_bev.1} parent=23 // pred_check
        %p526 = pneg %p522
      $region300: #{sparse_to_dense_bev.1} parent=23 // pred_check_branch
        %528 = sbr.rel (%p526) target = $region302
      $region301: #{sparse_to_dense_bev.1} parent=23 // pred_region
        %s529 = sshllo.u32 0, 1
        loop: start=0, step=1, limit=1
        $region303: #{sparse_to_dense_bev.1} parent=301 // loop_pre_header
          _
        $region304: #{sparse_to_dense_bev.1} parent=301 // loop_header
          %s531 = sphi 0, %s535
          %p532 = scmp.ge.s32.totalorder %s531, 1
          %s536 = sphi %s518, %s518
          %s537 = sphi %s519, %s519
        $region305: #{sparse_to_dense_bev.1} parent=301 // loop_header_branch
          %534 = sbr.rel (%p532) target = $region309
        $region306: #{sparse_to_dense_bev.1} parent=301 // loop_body
          %v538 = vld [vmem:[%s536] sm:%s529]
          %539 = vst [vmem:[%s537] sm:%s529] %v538
        $region307: #{sparse_to_dense_bev.1} parent=301 // loop_footer
          %s535 = sadd.s32 1, %s531
        $region308: #{sparse_to_dense_bev.1} parent=301 // loop_footer_branch
          %530 = sbr.rel target = $region304
        $region309: #{sparse_to_dense_bev.1} parent=301 // loop_exit
          _
      $region302: #{sparse_to_dense_bev.1} parent=23 // pred_fallthru
        _
      // Predicated region
      $region321: #{sparse_to_dense_bev.1} parent=23 // pred_check
        _
      $region322: #{sparse_to_dense_bev.1} parent=23 // pred_check_branch
        %563 = sbr.rel (0) target = $region324
      $region323: #{sparse_to_dense_bev.1} parent=23 // pred_region
        %564 = vsyncadd %s520, 16
      $region324: #{sparse_to_dense_bev.1} parent=23 // pred_fallthru
        _
      %s565 = sadd.s32 %s77, 10
      %s566 = sld [smem:[#allocation4 + %s565]]
      %s567 = scalar_lea.vmem %s75, 10
      %s568 = scalar_lea.vmem %s3, %s566
      %s569 = scalar_lea.sflag [#allocation2], 10
      %p571 = scmp.lt.u32.totalorder 1, 8
      %p572 = pneg %p571
      // Predicated region
      $region325: #{sparse_to_dense_bev.1} parent=23 // pred_check
        _
      $region326: #{sparse_to_dense_bev.1} parent=23 // pred_check_branch
        %574 = sbr.rel (%p571) target = $region328
      $region327: #{sparse_to_dense_bev.1} parent=23 // pred_region
        %s589 = sand.u32 1, 7
        %p590 = scmp.eq.s32.totalorder %s589, 0
        %p591 = pneg %p590
        // Predicated region
        $region340: #{sparse_to_dense_bev.1} parent=327 // pred_check
          _
        $region341: #{sparse_to_dense_bev.1} parent=327 // pred_check_branch
          %593 = sbr.rel (%p590) target = $region343
        $region342: #{sparse_to_dense_bev.1} parent=327 // pred_region
          %s594 = sand.u32 1, 7
          %s595 = ssub.s32 1, %s594
          %s596 = scalar_lea.vmem %s567, %s595
          %s597 = ssub.s32 1, %s594
          %s598 = scalar_lea.vmem %s568, %s597
          %s599 = sshllo.u32 0, %s594
          loop: start=0, step=1, limit=1
          $region344: #{sparse_to_dense_bev.1} parent=342 // loop_pre_header
            _
          $region345: #{sparse_to_dense_bev.1} parent=342 // loop_header
            %s601 = sphi 0, %s605
            %p602 = scmp.ge.s32.totalorder %s601, 1
            %s606 = sphi %s596, %s596
            %s607 = sphi %s598, %s598
          $region346: #{sparse_to_dense_bev.1} parent=342 // loop_header_branch
            %604 = sbr.rel (%p602) target = $region350
          $region347: #{sparse_to_dense_bev.1} parent=342 // loop_body
            %v608 = vld [vmem:[%s606] sm:%s599]
            %609 = vst [vmem:[%s607] sm:%s599] %v608
          $region348: #{sparse_to_dense_bev.1} parent=342 // loop_footer
            %s605 = sadd.s32 1, %s601
          $region349: #{sparse_to_dense_bev.1} parent=342 // loop_footer_branch
            %600 = sbr.rel target = $region345
          $region350: #{sparse_to_dense_bev.1} parent=342 // loop_exit
            _
        $region343: #{sparse_to_dense_bev.1} parent=327 // pred_fallthru
          _
      $region328: #{sparse_to_dense_bev.1} parent=23 // pred_fallthru
        _
      // Predicated region
      $region329: #{sparse_to_dense_bev.1} parent=23 // pred_check
        %p575 = pneg %p571
      $region330: #{sparse_to_dense_bev.1} parent=23 // pred_check_branch
        %577 = sbr.rel (%p575) target = $region332
      $region331: #{sparse_to_dense_bev.1} parent=23 // pred_region
        %s578 = sshllo.u32 0, 1
        loop: start=0, step=1, limit=1
        $region333: #{sparse_to_dense_bev.1} parent=331 // loop_pre_header
          _
        $region334: #{sparse_to_dense_bev.1} parent=331 // loop_header
          %s580 = sphi 0, %s584
          %p581 = scmp.ge.s32.totalorder %s580, 1
          %s585 = sphi %s567, %s567
          %s586 = sphi %s568, %s568
        $region335: #{sparse_to_dense_bev.1} parent=331 // loop_header_branch
          %583 = sbr.rel (%p581) target = $region339
        $region336: #{sparse_to_dense_bev.1} parent=331 // loop_body
          %v587 = vld [vmem:[%s585] sm:%s578]
          %588 = vst [vmem:[%s586] sm:%s578] %v587
        $region337: #{sparse_to_dense_bev.1} parent=331 // loop_footer
          %s584 = sadd.s32 1, %s580
        $region338: #{sparse_to_dense_bev.1} parent=331 // loop_footer_branch
          %579 = sbr.rel target = $region334
        $region339: #{sparse_to_dense_bev.1} parent=331 // loop_exit
          _
      $region332: #{sparse_to_dense_bev.1} parent=23 // pred_fallthru
        _
      // Predicated region
      $region351: #{sparse_to_dense_bev.1} parent=23 // pred_check
        _
      $region352: #{sparse_to_dense_bev.1} parent=23 // pred_check_branch
        %612 = sbr.rel (0) target = $region354
      $region353: #{sparse_to_dense_bev.1} parent=23 // pred_region
        %613 = vsyncadd %s569, 16
      $region354: #{sparse_to_dense_bev.1} parent=23 // pred_fallthru
        _
      %s614 = sadd.s32 %s77, 11
      %s615 = sld [smem:[#allocation4 + %s614]]
      %s616 = scalar_lea.vmem %s75, 11
      %s617 = scalar_lea.vmem %s3, %s615
      %s618 = scalar_lea.sflag [#allocation2], 11
      %p620 = scmp.lt.u32.totalorder 1, 8
      %p621 = pneg %p620
      // Predicated region
      $region355: #{sparse_to_dense_bev.1} parent=23 // pred_check
        _
      $region356: #{sparse_to_dense_bev.1} parent=23 // pred_check_branch
        %623 = sbr.rel (%p620) target = $region358
      $region357: #{sparse_to_dense_bev.1} parent=23 // pred_region
        %s638 = sand.u32 1, 7
        %p639 = scmp.eq.s32.totalorder %s638, 0
        %p640 = pneg %p639
        // Predicated region
        $region370: #{sparse_to_dense_bev.1} parent=357 // pred_check
          _
        $region371: #{sparse_to_dense_bev.1} parent=357 // pred_check_branch
          %642 = sbr.rel (%p639) target = $region373
        $region372: #{sparse_to_dense_bev.1} parent=357 // pred_region
          %s643 = sand.u32 1, 7
          %s644 = ssub.s32 1, %s643
          %s645 = scalar_lea.vmem %s616, %s644
          %s646 = ssub.s32 1, %s643
          %s647 = scalar_lea.vmem %s617, %s646
          %s648 = sshllo.u32 0, %s643
          loop: start=0, step=1, limit=1
          $region374: #{sparse_to_dense_bev.1} parent=372 // loop_pre_header
            _
          $region375: #{sparse_to_dense_bev.1} parent=372 // loop_header
            %s650 = sphi 0, %s654
            %p651 = scmp.ge.s32.totalorder %s650, 1
            %s655 = sphi %s645, %s645
            %s656 = sphi %s647, %s647
          $region376: #{sparse_to_dense_bev.1} parent=372 // loop_header_branch
            %653 = sbr.rel (%p651) target = $region380
          $region377: #{sparse_to_dense_bev.1} parent=372 // loop_body
            %v657 = vld [vmem:[%s655] sm:%s648]
            %658 = vst [vmem:[%s656] sm:%s648] %v657
          $region378: #{sparse_to_dense_bev.1} parent=372 // loop_footer
            %s654 = sadd.s32 1, %s650
          $region379: #{sparse_to_dense_bev.1} parent=372 // loop_footer_branch
            %649 = sbr.rel target = $region375
          $region380: #{sparse_to_dense_bev.1} parent=372 // loop_exit
            _
        $region373: #{sparse_to_dense_bev.1} parent=357 // pred_fallthru
          _
      $region358: #{sparse_to_dense_bev.1} parent=23 // pred_fallthru
        _
      // Predicated region
      $region359: #{sparse_to_dense_bev.1} parent=23 // pred_check
        %p624 = pneg %p620
      $region360: #{sparse_to_dense_bev.1} parent=23 // pred_check_branch
        %626 = sbr.rel (%p624) target = $region362
      $region361: #{sparse_to_dense_bev.1} parent=23 // pred_region
        %s627 = sshllo.u32 0, 1
        loop: start=0, step=1, limit=1
        $region363: #{sparse_to_dense_bev.1} parent=361 // loop_pre_header
          _
        $region364: #{sparse_to_dense_bev.1} parent=361 // loop_header
          %s629 = sphi 0, %s633
          %p630 = scmp.ge.s32.totalorder %s629, 1
          %s634 = sphi %s616, %s616
          %s635 = sphi %s617, %s617
        $region365: #{sparse_to_dense_bev.1} parent=361 // loop_header_branch
          %632 = sbr.rel (%p630) target = $region369
        $region366: #{sparse_to_dense_bev.1} parent=361 // loop_body
          %v636 = vld [vmem:[%s634] sm:%s627]
          %637 = vst [vmem:[%s635] sm:%s627] %v636
        $region367: #{sparse_to_dense_bev.1} parent=361 // loop_footer
          %s633 = sadd.s32 1, %s629
        $region368: #{sparse_to_dense_bev.1} parent=361 // loop_footer_branch
          %628 = sbr.rel target = $region364
        $region369: #{sparse_to_dense_bev.1} parent=361 // loop_exit
          _
      $region362: #{sparse_to_dense_bev.1} parent=23 // pred_fallthru
        _
      // Predicated region
      $region381: #{sparse_to_dense_bev.1} parent=23 // pred_check
        _
      $region382: #{sparse_to_dense_bev.1} parent=23 // pred_check_branch
        %661 = sbr.rel (0) target = $region384
      $region383: #{sparse_to_dense_bev.1} parent=23 // pred_region
        %662 = vsyncadd %s618, 16
      $region384: #{sparse_to_dense_bev.1} parent=23 // pred_fallthru
        _
      %s663 = sadd.s32 %s77, 12
      %s664 = sld [smem:[#allocation4 + %s663]]
      %s665 = scalar_lea.vmem %s75, 12
      %s666 = scalar_lea.vmem %s3, %s664
      %s667 = scalar_lea.sflag [#allocation2], 12
      %p669 = scmp.lt.u32.totalorder 1, 8
      %p670 = pneg %p669
      // Predicated region
      $region385: #{sparse_to_dense_bev.1} parent=23 // pred_check
        _
      $region386: #{sparse_to_dense_bev.1} parent=23 // pred_check_branch
        %672 = sbr.rel (%p669) target = $region388
      $region387: #{sparse_to_dense_bev.1} parent=23 // pred_region
        %s687 = sand.u32 1, 7
        %p688 = scmp.eq.s32.totalorder %s687, 0
        %p689 = pneg %p688
        // Predicated region
        $region400: #{sparse_to_dense_bev.1} parent=387 // pred_check
          _
        $region401: #{sparse_to_dense_bev.1} parent=387 // pred_check_branch
          %691 = sbr.rel (%p688) target = $region403
        $region402: #{sparse_to_dense_bev.1} parent=387 // pred_region
          %s692 = sand.u32 1, 7
          %s693 = ssub.s32 1, %s692
          %s694 = scalar_lea.vmem %s665, %s693
          %s695 = ssub.s32 1, %s692
          %s696 = scalar_lea.vmem %s666, %s695
          %s697 = sshllo.u32 0, %s692
          loop: start=0, step=1, limit=1
          $region404: #{sparse_to_dense_bev.1} parent=402 // loop_pre_header
            _
          $region405: #{sparse_to_dense_bev.1} parent=402 // loop_header
            %s699 = sphi 0, %s703
            %p700 = scmp.ge.s32.totalorder %s699, 1
            %s704 = sphi %s694, %s694
            %s705 = sphi %s696, %s696
          $region406: #{sparse_to_dense_bev.1} parent=402 // loop_header_branch
            %702 = sbr.rel (%p700) target = $region410
          $region407: #{sparse_to_dense_bev.1} parent=402 // loop_body
            %v706 = vld [vmem:[%s704] sm:%s697]
            %707 = vst [vmem:[%s705] sm:%s697] %v706
          $region408: #{sparse_to_dense_bev.1} parent=402 // loop_footer
            %s703 = sadd.s32 1, %s699
          $region409: #{sparse_to_dense_bev.1} parent=402 // loop_footer_branch
            %698 = sbr.rel target = $region405
          $region410: #{sparse_to_dense_bev.1} parent=402 // loop_exit
            _
        $region403: #{sparse_to_dense_bev.1} parent=387 // pred_fallthru
          _
      $region388: #{sparse_to_dense_bev.1} parent=23 // pred_fallthru
        _
      // Predicated region
      $region389: #{sparse_to_dense_bev.1} parent=23 // pred_check
        %p673 = pneg %p669
      $region390: #{sparse_to_dense_bev.1} parent=23 // pred_check_branch
        %675 = sbr.rel (%p673) target = $region392
      $region391: #{sparse_to_dense_bev.1} parent=23 // pred_region
        %s676 = sshllo.u32 0, 1
        loop: start=0, step=1, limit=1
        $region393: #{sparse_to_dense_bev.1} parent=391 // loop_pre_header
          _
        $region394: #{sparse_to_dense_bev.1} parent=391 // loop_header
          %s678 = sphi 0, %s682
          %p679 = scmp.ge.s32.totalorder %s678, 1
          %s683 = sphi %s665, %s665
          %s684 = sphi %s666, %s666
        $region395: #{sparse_to_dense_bev.1} parent=391 // loop_header_branch
          %681 = sbr.rel (%p679) target = $region399
        $region396: #{sparse_to_dense_bev.1} parent=391 // loop_body
          %v685 = vld [vmem:[%s683] sm:%s676]
          %686 = vst [vmem:[%s684] sm:%s676] %v685
        $region397: #{sparse_to_dense_bev.1} parent=391 // loop_footer
          %s682 = sadd.s32 1, %s678
        $region398: #{sparse_to_dense_bev.1} parent=391 // loop_footer_branch
          %677 = sbr.rel target = $region394
        $region399: #{sparse_to_dense_bev.1} parent=391 // loop_exit
          _
      $region392: #{sparse_to_dense_bev.1} parent=23 // pred_fallthru
        _
      // Predicated region
      $region411: #{sparse_to_dense_bev.1} parent=23 // pred_check
        _
      $region412: #{sparse_to_dense_bev.1} parent=23 // pred_check_branch
        %710 = sbr.rel (0) target = $region414
      $region413: #{sparse_to_dense_bev.1} parent=23 // pred_region
        %711 = vsyncadd %s667, 16
      $region414: #{sparse_to_dense_bev.1} parent=23 // pred_fallthru
        _
      %s712 = sadd.s32 %s77, 13
      %s713 = sld [smem:[#allocation4 + %s712]]
      %s714 = scalar_lea.vmem %s75, 13
      %s715 = scalar_lea.vmem %s3, %s713
      %s716 = scalar_lea.sflag [#allocation2], 13
      %p718 = scmp.lt.u32.totalorder 1, 8
      %p719 = pneg %p718
      // Predicated region
      $region415: #{sparse_to_dense_bev.1} parent=23 // pred_check
        _
      $region416: #{sparse_to_dense_bev.1} parent=23 // pred_check_branch
        %721 = sbr.rel (%p718) target = $region418
      $region417: #{sparse_to_dense_bev.1} parent=23 // pred_region
        %s736 = sand.u32 1, 7
        %p737 = scmp.eq.s32.totalorder %s736, 0
        %p738 = pneg %p737
        // Predicated region
        $region430: #{sparse_to_dense_bev.1} parent=417 // pred_check
          _
        $region431: #{sparse_to_dense_bev.1} parent=417 // pred_check_branch
          %740 = sbr.rel (%p737) target = $region433
        $region432: #{sparse_to_dense_bev.1} parent=417 // pred_region
          %s741 = sand.u32 1, 7
          %s742 = ssub.s32 1, %s741
          %s743 = scalar_lea.vmem %s714, %s742
          %s744 = ssub.s32 1, %s741
          %s745 = scalar_lea.vmem %s715, %s744
          %s746 = sshllo.u32 0, %s741
          loop: start=0, step=1, limit=1
          $region434: #{sparse_to_dense_bev.1} parent=432 // loop_pre_header
            _
          $region435: #{sparse_to_dense_bev.1} parent=432 // loop_header
            %s748 = sphi 0, %s752
            %p749 = scmp.ge.s32.totalorder %s748, 1
            %s753 = sphi %s743, %s743
            %s754 = sphi %s745, %s745
          $region436: #{sparse_to_dense_bev.1} parent=432 // loop_header_branch
            %751 = sbr.rel (%p749) target = $region440
          $region437: #{sparse_to_dense_bev.1} parent=432 // loop_body
            %v755 = vld [vmem:[%s753] sm:%s746]
            %756 = vst [vmem:[%s754] sm:%s746] %v755
          $region438: #{sparse_to_dense_bev.1} parent=432 // loop_footer
            %s752 = sadd.s32 1, %s748
          $region439: #{sparse_to_dense_bev.1} parent=432 // loop_footer_branch
            %747 = sbr.rel target = $region435
          $region440: #{sparse_to_dense_bev.1} parent=432 // loop_exit
            _
        $region433: #{sparse_to_dense_bev.1} parent=417 // pred_fallthru
          _
      $region418: #{sparse_to_dense_bev.1} parent=23 // pred_fallthru
        _
      // Predicated region
      $region419: #{sparse_to_dense_bev.1} parent=23 // pred_check
        %p722 = pneg %p718
      $region420: #{sparse_to_dense_bev.1} parent=23 // pred_check_branch
        %724 = sbr.rel (%p722) target = $region422
      $region421: #{sparse_to_dense_bev.1} parent=23 // pred_region
        %s725 = sshllo.u32 0, 1
        loop: start=0, step=1, limit=1
        $region423: #{sparse_to_dense_bev.1} parent=421 // loop_pre_header
          _
        $region424: #{sparse_to_dense_bev.1} parent=421 // loop_header
          %s727 = sphi 0, %s731
          %p728 = scmp.ge.s32.totalorder %s727, 1
          %s732 = sphi %s714, %s714
          %s733 = sphi %s715, %s715
        $region425: #{sparse_to_dense_bev.1} parent=421 // loop_header_branch
          %730 = sbr.rel (%p728) target = $region429
        $region426: #{sparse_to_dense_bev.1} parent=421 // loop_body
          %v734 = vld [vmem:[%s732] sm:%s725]
          %735 = vst [vmem:[%s733] sm:%s725] %v734
        $region427: #{sparse_to_dense_bev.1} parent=421 // loop_footer
          %s731 = sadd.s32 1, %s727
        $region428: #{sparse_to_dense_bev.1} parent=421 // loop_footer_branch
          %726 = sbr.rel target = $region424
        $region429: #{sparse_to_dense_bev.1} parent=421 // loop_exit
          _
      $region422: #{sparse_to_dense_bev.1} parent=23 // pred_fallthru
        _
      // Predicated region
      $region441: #{sparse_to_dense_bev.1} parent=23 // pred_check
        _
      $region442: #{sparse_to_dense_bev.1} parent=23 // pred_check_branch
        %759 = sbr.rel (0) target = $region444
      $region443: #{sparse_to_dense_bev.1} parent=23 // pred_region
        %760 = vsyncadd %s716, 16
      $region444: #{sparse_to_dense_bev.1} parent=23 // pred_fallthru
        _
      %s761 = sadd.s32 %s77, 14
      %s762 = sld [smem:[#allocation4 + %s761]]
      %s763 = scalar_lea.vmem %s75, 14
      %s764 = scalar_lea.vmem %s3, %s762
      %s765 = scalar_lea.sflag [#allocation2], 14
      %p767 = scmp.lt.u32.totalorder 1, 8
      %p768 = pneg %p767
      // Predicated region
      $region445: #{sparse_to_dense_bev.1} parent=23 // pred_check
        _
      $region446: #{sparse_to_dense_bev.1} parent=23 // pred_check_branch
        %770 = sbr.rel (%p767) target = $region448
      $region447: #{sparse_to_dense_bev.1} parent=23 // pred_region
        %s785 = sand.u32 1, 7
        %p786 = scmp.eq.s32.totalorder %s785, 0
        %p787 = pneg %p786
        // Predicated region
        $region460: #{sparse_to_dense_bev.1} parent=447 // pred_check
          _
        $region461: #{sparse_to_dense_bev.1} parent=447 // pred_check_branch
          %789 = sbr.rel (%p786) target = $region463
        $region462: #{sparse_to_dense_bev.1} parent=447 // pred_region
          %s790 = sand.u32 1, 7
          %s791 = ssub.s32 1, %s790
          %s792 = scalar_lea.vmem %s763, %s791
          %s793 = ssub.s32 1, %s790
          %s794 = scalar_lea.vmem %s764, %s793
          %s795 = sshllo.u32 0, %s790
          loop: start=0, step=1, limit=1
          $region464: #{sparse_to_dense_bev.1} parent=462 // loop_pre_header
            _
          $region465: #{sparse_to_dense_bev.1} parent=462 // loop_header
            %s797 = sphi 0, %s801
            %p798 = scmp.ge.s32.totalorder %s797, 1
            %s802 = sphi %s792, %s792
            %s803 = sphi %s794, %s794
          $region466: #{sparse_to_dense_bev.1} parent=462 // loop_header_branch
            %800 = sbr.rel (%p798) target = $region470
          $region467: #{sparse_to_dense_bev.1} parent=462 // loop_body
            %v804 = vld [vmem:[%s802] sm:%s795]
            %805 = vst [vmem:[%s803] sm:%s795] %v804
          $region468: #{sparse_to_dense_bev.1} parent=462 // loop_footer
            %s801 = sadd.s32 1, %s797
          $region469: #{sparse_to_dense_bev.1} parent=462 // loop_footer_branch
            %796 = sbr.rel target = $region465
          $region470: #{sparse_to_dense_bev.1} parent=462 // loop_exit
            _
        $region463: #{sparse_to_dense_bev.1} parent=447 // pred_fallthru
          _
      $region448: #{sparse_to_dense_bev.1} parent=23 // pred_fallthru
        _
      // Predicated region
      $region449: #{sparse_to_dense_bev.1} parent=23 // pred_check
        %p771 = pneg %p767
      $region450: #{sparse_to_dense_bev.1} parent=23 // pred_check_branch
        %773 = sbr.rel (%p771) target = $region452
      $region451: #{sparse_to_dense_bev.1} parent=23 // pred_region
        %s774 = sshllo.u32 0, 1
        loop: start=0, step=1, limit=1
        $region453: #{sparse_to_dense_bev.1} parent=451 // loop_pre_header
          _
        $region454: #{sparse_to_dense_bev.1} parent=451 // loop_header
          %s776 = sphi 0, %s780
          %p777 = scmp.ge.s32.totalorder %s776, 1
          %s781 = sphi %s763, %s763
          %s782 = sphi %s764, %s764
        $region455: #{sparse_to_dense_bev.1} parent=451 // loop_header_branch
          %779 = sbr.rel (%p777) target = $region459
        $region456: #{sparse_to_dense_bev.1} parent=451 // loop_body
          %v783 = vld [vmem:[%s781] sm:%s774]
          %784 = vst [vmem:[%s782] sm:%s774] %v783
        $region457: #{sparse_to_dense_bev.1} parent=451 // loop_footer
          %s780 = sadd.s32 1, %s776
        $region458: #{sparse_to_dense_bev.1} parent=451 // loop_footer_branch
          %775 = sbr.rel target = $region454
        $region459: #{sparse_to_dense_bev.1} parent=451 // loop_exit
          _
      $region452: #{sparse_to_dense_bev.1} parent=23 // pred_fallthru
        _
      // Predicated region
      $region471: #{sparse_to_dense_bev.1} parent=23 // pred_check
        _
      $region472: #{sparse_to_dense_bev.1} parent=23 // pred_check_branch
        %808 = sbr.rel (0) target = $region474
      $region473: #{sparse_to_dense_bev.1} parent=23 // pred_region
        %809 = vsyncadd %s765, 16
      $region474: #{sparse_to_dense_bev.1} parent=23 // pred_fallthru
        _
      %s810 = sadd.s32 %s77, 15
      %s811 = sld [smem:[#allocation4 + %s810]]
      %s812 = scalar_lea.vmem %s75, 15
      %s813 = scalar_lea.vmem %s3, %s811
      %s814 = scalar_lea.sflag [#allocation2], 15
      %p816 = scmp.lt.u32.totalorder 1, 8
      %p817 = pneg %p816
      // Predicated region
      $region475: #{sparse_to_dense_bev.1} parent=23 // pred_check
        _
      $region476: #{sparse_to_dense_bev.1} parent=23 // pred_check_branch
        %819 = sbr.rel (%p816) target = $region478
      $region477: #{sparse_to_dense_bev.1} parent=23 // pred_region
        %s834 = sand.u32 1, 7
        %p835 = scmp.eq.s32.totalorder %s834, 0
        %p836 = pneg %p835
        // Predicated region
        $region490: #{sparse_to_dense_bev.1} parent=477 // pred_check
          _
        $region491: #{sparse_to_dense_bev.1} parent=477 // pred_check_branch
          %838 = sbr.rel (%p835) target = $region493
        $region492: #{sparse_to_dense_bev.1} parent=477 // pred_region
          %s839 = sand.u32 1, 7
          %s840 = ssub.s32 1, %s839
          %s841 = scalar_lea.vmem %s812, %s840
          %s842 = ssub.s32 1, %s839
          %s843 = scalar_lea.vmem %s813, %s842
          %s844 = sshllo.u32 0, %s839
          loop: start=0, step=1, limit=1
          $region494: #{sparse_to_dense_bev.1} parent=492 // loop_pre_header
            _
          $region495: #{sparse_to_dense_bev.1} parent=492 // loop_header
            %s846 = sphi 0, %s850
            %p847 = scmp.ge.s32.totalorder %s846, 1
            %s851 = sphi %s841, %s841
            %s852 = sphi %s843, %s843
          $region496: #{sparse_to_dense_bev.1} parent=492 // loop_header_branch
            %849 = sbr.rel (%p847) target = $region500
          $region497: #{sparse_to_dense_bev.1} parent=492 // loop_body
            %v853 = vld [vmem:[%s851] sm:%s844]
            %854 = vst [vmem:[%s852] sm:%s844] %v853
          $region498: #{sparse_to_dense_bev.1} parent=492 // loop_footer
            %s850 = sadd.s32 1, %s846
          $region499: #{sparse_to_dense_bev.1} parent=492 // loop_footer_branch
            %845 = sbr.rel target = $region495
          $region500: #{sparse_to_dense_bev.1} parent=492 // loop_exit
            _
        $region493: #{sparse_to_dense_bev.1} parent=477 // pred_fallthru
          _
      $region478: #{sparse_to_dense_bev.1} parent=23 // pred_fallthru
        _
      // Predicated region
      $region479: #{sparse_to_dense_bev.1} parent=23 // pred_check
        %p820 = pneg %p816
      $region480: #{sparse_to_dense_bev.1} parent=23 // pred_check_branch
        %822 = sbr.rel (%p820) target = $region482
      $region481: #{sparse_to_dense_bev.1} parent=23 // pred_region
        %s823 = sshllo.u32 0, 1
        loop: start=0, step=1, limit=1
        $region483: #{sparse_to_dense_bev.1} parent=481 // loop_pre_header
          _
        $region484: #{sparse_to_dense_bev.1} parent=481 // loop_header
          %s825 = sphi 0, %s829
          %p826 = scmp.ge.s32.totalorder %s825, 1
          %s830 = sphi %s812, %s812
          %s831 = sphi %s813, %s813
        $region485: #{sparse_to_dense_bev.1} parent=481 // loop_header_branch
          %828 = sbr.rel (%p826) target = $region489
        $region486: #{sparse_to_dense_bev.1} parent=481 // loop_body
          %v832 = vld [vmem:[%s830] sm:%s823]
          %833 = vst [vmem:[%s831] sm:%s823] %v832
        $region487: #{sparse_to_dense_bev.1} parent=481 // loop_footer
          %s829 = sadd.s32 1, %s825
        $region488: #{sparse_to_dense_bev.1} parent=481 // loop_footer_branch
          %824 = sbr.rel target = $region484
        $region489: #{sparse_to_dense_bev.1} parent=481 // loop_exit
          _
      $region482: #{sparse_to_dense_bev.1} parent=23 // pred_fallthru
        _
      // Predicated region
      $region501: #{sparse_to_dense_bev.1} parent=23 // pred_check
        _
      $region502: #{sparse_to_dense_bev.1} parent=23 // pred_check_branch
        %857 = sbr.rel (0) target = $region504
      $region503: #{sparse_to_dense_bev.1} parent=23 // pred_region
        %858 = vsyncadd %s814, 16
      $region504: #{sparse_to_dense_bev.1} parent=23 // pred_fallthru
        _
      %860 = dma.done [#allocation2], 16
      %862 = dma.done %s128, 16
      %864 = dma.done %s177, 16
      %866 = dma.done %s226, 16
      %868 = dma.done %s275, 16
      %870 = dma.done %s324, 16
      %872 = dma.done %s373, 16
      %874 = dma.done %s422, 16
      %876 = dma.done %s471, 16
      %878 = dma.done %s520, 16
      %880 = dma.done %s569, 16
      %882 = dma.done %s618, 16
      %884 = dma.done %s667, 16
      %886 = dma.done %s716, 16
      %888 = dma.done %s765, 16
      %890 = dma.done %s814, 16
    $region24: #{sparse_to_dense_bev.1} parent=5 // pred_fallthru
      _
  $region6: #{sparse_to_dense_bev.1} parent=0 // loop_footer
    %s19 = sadd.s32 1, %s15
  $region7: #{sparse_to_dense_bev.1} parent=0 // loop_footer_branch
    %14 = sbr.rel target = $region3
  $region8: #{sparse_to_dense_bev.1} parent=0 // loop_exit
    _
  %891 = vsyncmov [#allocation2]
  %s892 = vpop.sfrf %891
  %p893 = scmp.eq.s32.totalorder %s892, 0
  %p894 = pneg %p893
  %896 = shalt.err (%p894)
  %s897 = scalar_lea.sflag [#allocation2], 1
  %898 = vsyncmov %s897
  %s899 = vpop.sfrf %898
  %p900 = scmp.eq.s32.totalorder %s899, 0
  %p901 = pneg %p900
  %903 = shalt.err (%p901)
  %s904 = scalar_lea.sflag [#allocation2], 2
  %905 = vsyncmov %s904
  %s906 = vpop.sfrf %905
  %p907 = scmp.eq.s32.totalorder %s906, 0
  %p908 = pneg %p907
  %910 = shalt.err (%p908)
  %s911 = scalar_lea.sflag [#allocation2], 3
  %912 = vsyncmov %s911
  %s913 = vpop.sfrf %912
  %p914 = scmp.eq.s32.totalorder %s913, 0
  %p915 = pneg %p914
  %917 = shalt.err (%p915)
  %s918 = scalar_lea.sflag [#allocation2], 4
  %919 = vsyncmov %s918
  %s920 = vpop.sfrf %919
  %p921 = scmp.eq.s32.totalorder %s920, 0
  %p922 = pneg %p921
  %924 = shalt.err (%p922)
  %s925 = scalar_lea.sflag [#allocation2], 5
  %926 = vsyncmov %s925
  %s927 = vpop.sfrf %926
  %p928 = scmp.eq.s32.totalorder %s927, 0
  %p929 = pneg %p928
  %931 = shalt.err (%p929)
  %s932 = scalar_lea.sflag [#allocation2], 6
  %933 = vsyncmov %s932
  %s934 = vpop.sfrf %933
  %p935 = scmp.eq.s32.totalorder %s934, 0
  %p936 = pneg %p935
  %938 = shalt.err (%p936)
  %s939 = scalar_lea.sflag [#allocation2], 7
  %940 = vsyncmov %s939
  %s941 = vpop.sfrf %940
  %p942 = scmp.eq.s32.totalorder %s941, 0
  %p943 = pneg %p942
  %945 = shalt.err (%p943)
  %s946 = scalar_lea.sflag [#allocation2], 8
  %947 = vsyncmov %s946
  %s948 = vpop.sfrf %947
  %p949 = scmp.eq.s32.totalorder %s948, 0
  %p950 = pneg %p949
  %952 = shalt.err (%p950)
  %s953 = scalar_lea.sflag [#allocation2], 9
  %954 = vsyncmov %s953
  %s955 = vpop.sfrf %954
  %p956 = scmp.eq.s32.totalorder %s955, 0
  %p957 = pneg %p956
  %959 = shalt.err (%p957)
  %s960 = scalar_lea.sflag [#allocation2], 10
  %961 = vsyncmov %s960
  %s962 = vpop.sfrf %961
  %p963 = scmp.eq.s32.totalorder %s962, 0
  %p964 = pneg %p963
  %966 = shalt.err (%p964)
  %s967 = scalar_lea.sflag [#allocation2], 11
  %968 = vsyncmov %s967
  %s969 = vpop.sfrf %968
  %p970 = scmp.eq.s32.totalorder %s969, 0
  %p971 = pneg %p970
  %973 = shalt.err (%p971)
  %s974 = scalar_lea.sflag [#allocation2], 12
  %975 = vsyncmov %s974
  %s976 = vpop.sfrf %975
  %p977 = scmp.eq.s32.totalorder %s976, 0
  %p978 = pneg %p977
  %980 = shalt.err (%p978)
  %s981 = scalar_lea.sflag [#allocation2], 13
  %982 = vsyncmov %s981
  %s983 = vpop.sfrf %982
  %p984 = scmp.eq.s32.totalorder %s983, 0
  %p985 = pneg %p984
  %987 = shalt.err (%p985)
  %s988 = scalar_lea.sflag [#allocation2], 14
  %989 = vsyncmov %s988
  %s990 = vpop.sfrf %989
  %p991 = scmp.eq.s32.totalorder %s990, 0
  %p992 = pneg %p991
  %994 = shalt.err (%p992)
  %s995 = scalar_lea.sflag [#allocation2], 15
  %996 = vsyncmov %s995
  %s997 = vpop.sfrf %996
  %p998 = scmp.eq.s32.totalorder %s997, 0
  %p999 = pneg %p998
  %1001 = shalt.err (%p999)

</llo_original>
